<compile_context>
chip_gen: v7x
topology: tpu7x:2x2x1
jax: 0.10.0
libtpu: 0.0.40
codegen_flags: <defaults>
</compile_context>

<pallas_src>
import jax
import jax.numpy as jnp
from jax.experimental import pallas as pl
from jax.experimental.pallas import tpu as pltpu


def _round_up(v, m):
    return ((v + m - 1) // m) * m


# ----------------------------------------------------------------------------
# Fused Pallas kernel:
#   hidden = relu( sum_i relu(win_i @ Wf + bf) @ Wm[i] + bm )
#   logits = hidden @ Wd + bd                         (Wd padded to 128 lanes)
# ----------------------------------------------------------------------------
def _make_fused_kernel(slide_num, win_len, win_stride, enc_len):
    def kernel(x_ref, wf_ref, bf_ref, wm_ref, bm_ref, wd_ref, bd_ref, o_ref):
        # x_ref: (tm, W*H) fp32, W-major flattening (index = w*H + h).
        # Cast to bf16 in-kernel (saves a full wrapper-side HBM cast pass).
        x_bf = x_ref[...].astype(jnp.bfloat16)
        bf = bf_ref[...]                       # (1, enc_len) fp32

        # Sliding-window feature extractor + mapper, fused per window.
        # TODO(synk): Dropout before the mapper Linear is a no-op here
        # (inference mode).
        h_acc = None
        for i in range(slide_num):
            s = i * win_stride
            win = x_bf[:, s:s + win_len]       # contiguous 40x40 window slab
            f = jnp.dot(win, wf_ref[...],
                        preferred_element_type=jnp.float32)
            f = jnp.maximum(f + bf, 0.0).astype(wm_ref.dtype)   # (tm, enc)
            p = jnp.dot(f, wm_ref[i * enc_len:(i + 1) * enc_len, :],
                        preferred_element_type=jnp.float32)     # (tm, hidden)
            h_acc = p if h_acc is None else h_acc + p

        hidden = jnp.maximum(h_acc + bm_ref[...], 0.0).astype(wd_ref.dtype)

        # decoder head (output padded to a lane-dense 128 columns)
        logits = jnp.dot(hidden, wd_ref[...],
                         preferred_element_type=jnp.float32)
        o_ref[...] = (logits + bd_ref[...]).astype(o_ref.dtype)

    return kernel


# ----------------------------------------------------------------------------
# Model: CaptchaGenerator_40x40
# ----------------------------------------------------------------------------
class CaptchaGenerator40x40:
    SLIDE_WIDTH = 40

    def __init__(self, key, *, encoder_len=64, hidden_size=128, slide_x=5,
                 total_width=60, height=40, num_classes=36):
        self.slide_x = slide_x
        self.encoder_len = encoder_len
        self.hidden_size = hidden_size
        self.height = height
        self.total_width = total_width
        self.slide_num = (total_width - self.SLIDE_WIDTH) // slide_x + 1
        self.num_classes = num_classes

        k1, k2, k3, k4, k5, k6 = jax.random.split(key, 6)
        scale = 0.02
        feat_in = height * self.SLIDE_WIDTH  # one 40x40 window, 1 channel

        # TODO(synk): CaptchFeatureExtractor40x40 definition not provided;
        # stand-in is a single Linear(H*40 -> encoder_len) + ReLU per window.
        self.wf = scale * jax.random.normal(k1, (feat_in, encoder_len), jnp.float32)
        self.bf = scale * jax.random.normal(k2, (encoder_len,), jnp.float32)

        # mapper: Dropout (inference identity) -> Linear -> ReLU
        self.wm = scale * jax.random.normal(
            k3, (encoder_len * self.slide_num, hidden_size), jnp.float32)
        self.bm = scale * jax.random.normal(k4, (hidden_size,), jnp.float32)

        # TODO(synk): CaptchaDecoder definition not provided; stand-in is a
        # single Linear(hidden_size -> num_classes) head.
        self.wd = scale * jax.random.normal(k5, (hidden_size, num_classes), jnp.float32)
        self.bd = scale * jax.random.normal(k6, (num_classes,), jnp.float32)

        # ---- kernel-side parameters, prepared ONCE at init -----------------
        # wf permuted to the W-major window flattening (index = w*H + h) so
        # kernel window slabs line up with contiguous columns.  bf16 weights,
        # fp32 (1, N) biases.
        wf_wm = self.wf.reshape(height, self.SLIDE_WIDTH, encoder_len)
        wf_wm = jnp.transpose(wf_wm, (1, 0, 2)).reshape(
            self.SLIDE_WIDTH * height, encoder_len)
        self.wf_k = wf_wm.astype(jnp.bfloat16)
        self.bf_k = self.bf.reshape(1, -1)

        self.wm_k = self.wm.astype(jnp.bfloat16)
        self.bm_k = self.bm.reshape(1, -1)

        # decoder padded to 128 output lanes -> lane-dense final matmul/store
        self.n3_pad = _round_up(num_classes, 128)
        wd_pad = jnp.zeros((hidden_size, self.n3_pad), jnp.float32)
        wd_pad = wd_pad.at[:, :num_classes].set(self.wd)
        bd_pad = jnp.zeros((self.n3_pad,), jnp.float32).at[:num_classes].set(self.bd)
        self.wd_k = wd_pad.astype(jnp.bfloat16)
        self.bd_k = bd_pad.reshape(1, -1)

    def __call__(self, x):
        # x: (B, 1, H, W)  (NCHW, like PyTorch)
        B, C, H, W = x.shape
        assert C == 1 and H == self.height and W == self.total_width

        # W-major flatten (index = w*H + h): every 40x40 window becomes a
        # contiguous win_len = 40*H column slab inside the kernel.  No astype,
        # no padding here — the kernel casts to bf16 and the cdiv grid's
        # masked partial last block handles ragged batches.
        x_wm = jnp.transpose(x.reshape(B, H, W), (0, 2, 1)).reshape(B, W * H)

        # Row-block size: whole batch for tiny B (grid of 1); otherwise at
        # least 2 blocks (v7x has 2 TensorCores) with tm capped at 512 rows
        # (v6e/v7x roofline; ~2*512*2400*4 B of input buffers in VMEM).
        if B <= 16:
            tm = B
        else:
            tm = min(512, _round_up(-(-B // 2), 8))
        grid = (pl.cdiv(B, tm),)

        K0 = H * W
        N1 = self.encoder_len
        NM = self.encoder_len * self.slide_num
        N2 = self.hidden_size
        N3p = self.n3_pad

        kernel = _make_fused_kernel(
            slide_num=self.slide_num,
            win_len=self.SLIDE_WIDTH * H,
            win_stride=self.slide_x * H,
            enc_len=self.encoder_len,
        )

        out = pl.pallas_call(
            kernel,
            out_shape=jax.ShapeDtypeStruct((B, N3p), jnp.float32),
            grid_spec=pltpu.PrefetchScalarGridSpec(
                num_scalar_prefetch=0,
                grid=grid,
                in_specs=[
                    pl.BlockSpec((tm, K0), lambda i: (i, 0)),      # image rows (fp32)
                    pl.BlockSpec((self.SLIDE_WIDTH * H, N1), lambda i: (0, 0)),  # wf
                    pl.BlockSpec((1, N1), lambda i: (0, 0)),       # bf
                    pl.BlockSpec((NM, N2), lambda i: (0, 0)),      # wm
                    pl.BlockSpec((1, N2), lambda i: (0, 0)),       # bm
                    pl.BlockSpec((N2, N3p), lambda i: (0, 0)),     # wd (padded)
                    pl.BlockSpec((1, N3p), lambda i: (0, 0)),      # bd (padded)
                ],
                out_specs=pl.BlockSpec((tm, N3p), lambda i: (i, 0)),
            ),
            compiler_params=pltpu.CompilerParams(
                dimension_semantics=("parallel",),
            ),
        )(x_wm, self.wf_k, self.bf_k, self.wm_k, self.bm_k,
          self.wd_k, self.bd_k)

        return out[:, :self.num_classes]


# ----------------------------------------------------------------------------
# Pure-JAX fp32 reference mirroring the PyTorch forward (same stand-in layers)
# ----------------------------------------------------------------------------
def reference_forward(model, x):
    B, _, H, _ = x.shape
    sx, sw = model.slide_x, model.SLIDE_WIDTH
    chunks = [x[:, :, :, i * sx:i * sx + sw] for i in range(model.slide_num)]
    chars = jnp.stack(chunks, axis=0).transpose(1, 0, 2, 3, 4)
    chars = chars.reshape(-1, H * sw)
    feats = jax.nn.relu(chars @ model.wf + model.bf)
    feats = feats.reshape(B, -1)
    hidden = jax.nn.relu(feats @ model.wm + model.bm)
    return hidden @ model.wd + model.bd


# ----------------------------------------------------------------------------
if __name__ == "__main__":
    key = jax.random.PRNGKey(0)
    k_param, k_x = jax.random.split(key)

    model = CaptchaGenerator40x40(
        k_param,
        encoder_len=64,
        hidden_size=128,
        slide_x=5,
        total_width=60,
        height=40,
        num_classes=36,
    )

    # small test input: batch=2, 1 channel, 40 rows, 60 cols -> slide_num = 5
    x = jax.random.normal(k_x, (2, 1, 40, 60), jnp.float32)

    out = jax.jit(model.__call__)(x)
    jax.block_until_ready(out)

    assert out.shape == (2, 36), out.shape
    assert bool(jnp.all(jnp.isfinite(out)))

    # loose tolerance: kernel runs bf16 matmuls with fp32 accumulation
    ref = reference_forward(model, x)
    assert jnp.allclose(out, ref, rtol=2e-1, atol=2e-2), float(
        jnp.max(jnp.abs(out - ref)))

    print("KERNEL_OK")
</pallas_src>

<mosaic_0001>
module attributes {stable_mosaic.version = 11 : i64} {
  func.func @kernel(%arg0: i32, %arg1: memref<2x2400xf32, #tpu.memory_space<vmem>>, %arg2: memref<1600x64xbf16, #tpu.memory_space<vmem>>, %arg3: memref<1x64xf32, #tpu.memory_space<vmem>>, %arg4: memref<320x128xbf16, #tpu.memory_space<vmem>>, %arg5: memref<1x128xf32, #tpu.memory_space<vmem>>, %arg6: memref<128x128xbf16, #tpu.memory_space<vmem>>, %arg7: memref<1x128xf32, #tpu.memory_space<vmem>>, %arg8: memref<2x128xf32, #tpu.memory_space<vmem>>) attributes {dimension_semantics = [#tpu.dimension_semantics<parallel>], iteration_bounds = array<i64: 1>, scalar_prefetch = 0 : i64, scratch_operands = 0 : i64, tpu.core_type = #tpu.core_type<tc>, window_params = [{transform_indices = @transform_0, window_bounds = array<i64: 2, 2400>}, {pipeline_mode = #tpu.pipeline_mode<synchronous>, transform_indices = @transform_1, window_bounds = array<i64: 1600, 64>}, {pipeline_mode = #tpu.pipeline_mode<synchronous>, transform_indices = @transform_2, window_bounds = array<i64: 1, 64>}, {pipeline_mode = #tpu.pipeline_mode<synchronous>, transform_indices = @transform_3, window_bounds = array<i64: 320, 128>}, {pipeline_mode = #tpu.pipeline_mode<synchronous>, transform_indices = @transform_4, window_bounds = array<i64: 1, 128>}, {pipeline_mode = #tpu.pipeline_mode<synchronous>, transform_indices = @transform_5, window_bounds = array<i64: 128, 128>}, {pipeline_mode = #tpu.pipeline_mode<synchronous>, transform_indices = @transform_6, window_bounds = array<i64: 1, 128>}, {transform_indices = @transform_7, window_bounds = array<i64: 2, 128>}]} {
    %c0 = arith.constant 0 : index
    %c0_0 = arith.constant 0 : index
    %0 = vector.load %arg1[%c0, %c0_0] : memref<2x2400xf32, #tpu.memory_space<vmem>>, vector<2x2400xf32>
    %1 = arith.truncf %0 : vector<2x2400xf32> to vector<2x2400xbf16>
    %c0_1 = arith.constant 0 : index
    %c0_2 = arith.constant 0 : index
    %2 = vector.load %arg3[%c0_1, %c0_2] : memref<1x64xf32, #tpu.memory_space<vmem>>, vector<1x64xf32>
    %3 = vector.extract_strided_slice %1 {offsets = [0, 0], sizes = [2, 1600], strides = [1, 1]} : vector<2x2400xbf16> to vector<2x1600xbf16>
    %c0_3 = arith.constant 0 : index
    %c0_4 = arith.constant 0 : index
    %4 = vector.load %arg2[%c0_3, %c0_4] : memref<1600x64xbf16, #tpu.memory_space<vmem>>, vector<1600x64xbf16>
    %cst = arith.constant dense<0.000000e+00> : vector<2x64xf32>
    %5 = tpu.matmul %3, %4, %cst {dimension_numbers = #tpu.dot_dimension_numbers<[1], [0], [0], [1], [0, 0, 1, 1], [], []>} : vector<2x1600xbf16>, vector<1600x64xbf16>, vector<2x64xf32> -> vector<2x64xf32>
    %6 = vector.broadcast %2 : vector<1x64xf32> to vector<2x64xf32>
    %7 = arith.addf %5, %6 : vector<2x64xf32>
    %cst_5 = arith.constant 0.000000e+00 : f32
    %8 = vector.broadcast %cst_5 : f32 to vector<2x64xf32>
    %9 = arith.maximumf %7, %8 : vector<2x64xf32>
    %10 = arith.truncf %9 : vector<2x64xf32> to vector<2x64xbf16>
    %c0_6 = arith.constant 0 : index
    %c0_7 = arith.constant 0 : index
    %11 = vector.load %arg4[%c0_6, %c0_7] : memref<320x128xbf16, #tpu.memory_space<vmem>>, vector<64x128xbf16>
    %cst_8 = arith.constant dense<0.000000e+00> : vector<2x128xf32>
    %12 = tpu.matmul %10, %11, %cst_8 {dimension_numbers = #tpu.dot_dimension_numbers<[1], [0], [0], [1], [0, 0, 1, 1], [], []>} : vector<2x64xbf16>, vector<64x128xbf16>, vector<2x128xf32> -> vector<2x128xf32>
    %13 = vector.extract_strided_slice %1 {offsets = [0, 200], sizes = [2, 1600], strides = [1, 1]} : vector<2x2400xbf16> to vector<2x1600xbf16>
    %c0_9 = arith.constant 0 : index
    %c0_10 = arith.constant 0 : index
    %14 = vector.load %arg2[%c0_9, %c0_10] : memref<1600x64xbf16, #tpu.memory_space<vmem>>, vector<1600x64xbf16>
    %cst_11 = arith.constant dense<0.000000e+00> : vector<2x64xf32>
    %15 = tpu.matmul %13, %14, %cst_11 {dimension_numbers = #tpu.dot_dimension_numbers<[1], [0], [0], [1], [0, 0, 1, 1], [], []>} : vector<2x1600xbf16>, vector<1600x64xbf16>, vector<2x64xf32> -> vector<2x64xf32>
    %16 = vector.broadcast %2 : vector<1x64xf32> to vector<2x64xf32>
    %17 = arith.addf %15, %16 : vector<2x64xf32>
    %cst_12 = arith.constant 0.000000e+00 : f32
    %18 = vector.broadcast %cst_12 : f32 to vector<2x64xf32>
    %19 = arith.maximumf %17, %18 : vector<2x64xf32>
    %20 = arith.truncf %19 : vector<2x64xf32> to vector<2x64xbf16>
    %c64 = arith.constant 64 : index
    %c0_13 = arith.constant 0 : index
    %21 = vector.load %arg4[%c64, %c0_13] : memref<320x128xbf16, #tpu.memory_space<vmem>>, vector<64x128xbf16>
    %cst_14 = arith.constant dense<0.000000e+00> : vector<2x128xf32>
    %22 = tpu.matmul %20, %21, %cst_14 {dimension_numbers = #tpu.dot_dimension_numbers<[1], [0], [0], [1], [0, 0, 1, 1], [], []>} : vector<2x64xbf16>, vector<64x128xbf16>, vector<2x128xf32> -> vector<2x128xf32>
    %23 = arith.addf %12, %22 : vector<2x128xf32>
    %24 = vector.extract_strided_slice %1 {offsets = [0, 400], sizes = [2, 1600], strides = [1, 1]} : vector<2x2400xbf16> to vector<2x1600xbf16>
    %c0_15 = arith.constant 0 : index
    %c0_16 = arith.constant 0 : index
    %25 = vector.load %arg2[%c0_15, %c0_16] : memref<1600x64xbf16, #tpu.memory_space<vmem>>, vector<1600x64xbf16>
    %cst_17 = arith.constant dense<0.000000e+00> : vector<2x64xf32>
    %26 = tpu.matmul %24, %25, %cst_17 {dimension_numbers = #tpu.dot_dimension_numbers<[1], [0], [0], [1], [0, 0, 1, 1], [], []>} : vector<2x1600xbf16>, vector<1600x64xbf16>, vector<2x64xf32> -> vector<2x64xf32>
    %27 = vector.broadcast %2 : vector<1x64xf32> to vector<2x64xf32>
    %28 = arith.addf %26, %27 : vector<2x64xf32>
    %cst_18 = arith.constant 0.000000e+00 : f32
    %29 = vector.broadcast %cst_18 : f32 to vector<2x64xf32>
    %30 = arith.maximumf %28, %29 : vector<2x64xf32>
    %31 = arith.truncf %30 : vector<2x64xf32> to vector<2x64xbf16>
    %c128 = arith.constant 128 : index
    %c0_19 = arith.constant 0 : index
    %32 = vector.load %arg4[%c128, %c0_19] : memref<320x128xbf16, #tpu.memory_space<vmem>>, vector<64x128xbf16>
    %cst_20 = arith.constant dense<0.000000e+00> : vector<2x128xf32>
    %33 = tpu.matmul %31, %32, %cst_20 {dimension_numbers = #tpu.dot_dimension_numbers<[1], [0], [0], [1], [0, 0, 1, 1], [], []>} : vector<2x64xbf16>, vector<64x128xbf16>, vector<2x128xf32> -> vector<2x128xf32>
    %34 = arith.addf %23, %33 : vector<2x128xf32>
    %35 = vector.extract_strided_slice %1 {offsets = [0, 600], sizes = [2, 1600], strides = [1, 1]} : vector<2x2400xbf16> to vector<2x1600xbf16>
    %c0_21 = arith.constant 0 : index
    %c0_22 = arith.constant 0 : index
    %36 = vector.load %arg2[%c0_21, %c0_22] : memref<1600x64xbf16, #tpu.memory_space<vmem>>, vector<1600x64xbf16>
    %cst_23 = arith.constant dense<0.000000e+00> : vector<2x64xf32>
    %37 = tpu.matmul %35, %36, %cst_23 {dimension_numbers = #tpu.dot_dimension_numbers<[1], [0], [0], [1], [0, 0, 1, 1], [], []>} : vector<2x1600xbf16>, vector<1600x64xbf16>, vector<2x64xf32> -> vector<2x64xf32>
    %38 = vector.broadcast %2 : vector<1x64xf32> to vector<2x64xf32>
    %39 = arith.addf %37, %38 : vector<2x64xf32>
    %cst_24 = arith.constant 0.000000e+00 : f32
    %40 = vector.broadcast %cst_24 : f32 to vector<2x64xf32>
    %41 = arith.maximumf %39, %40 : vector<2x64xf32>
    %42 = arith.truncf %41 : vector<2x64xf32> to vector<2x64xbf16>
    %c192 = arith.constant 192 : index
    %c0_25 = arith.constant 0 : index
    %43 = vector.load %arg4[%c192, %c0_25] : memref<320x128xbf16, #tpu.memory_space<vmem>>, vector<64x128xbf16>
    %cst_26 = arith.constant dense<0.000000e+00> : vector<2x128xf32>
    %44 = tpu.matmul %42, %43, %cst_26 {dimension_numbers = #tpu.dot_dimension_numbers<[1], [0], [0], [1], [0, 0, 1, 1], [], []>} : vector<2x64xbf16>, vector<64x128xbf16>, vector<2x128xf32> -> vector<2x128xf32>
    %45 = arith.addf %34, %44 : vector<2x128xf32>
    %46 = vector.extract_strided_slice %1 {offsets = [0, 800], sizes = [2, 1600], strides = [1, 1]} : vector<2x2400xbf16> to vector<2x1600xbf16>
    %c0_27 = arith.constant 0 : index
    %c0_28 = arith.constant 0 : index
    %47 = vector.load %arg2[%c0_27, %c0_28] : memref<1600x64xbf16, #tpu.memory_space<vmem>>, vector<1600x64xbf16>
    %cst_29 = arith.constant dense<0.000000e+00> : vector<2x64xf32>
    %48 = tpu.matmul %46, %47, %cst_29 {dimension_numbers = #tpu.dot_dimension_numbers<[1], [0], [0], [1], [0, 0, 1, 1], [], []>} : vector<2x1600xbf16>, vector<1600x64xbf16>, vector<2x64xf32> -> vector<2x64xf32>
    %49 = vector.broadcast %2 : vector<1x64xf32> to vector<2x64xf32>
    %50 = arith.addf %48, %49 : vector<2x64xf32>
    %cst_30 = arith.constant 0.000000e+00 : f32
    %51 = vector.broadcast %cst_30 : f32 to vector<2x64xf32>
    %52 = arith.maximumf %50, %51 : vector<2x64xf32>
    %53 = arith.truncf %52 : vector<2x64xf32> to vector<2x64xbf16>
    %c256 = arith.constant 256 : index
    %c0_31 = arith.constant 0 : index
    %54 = vector.load %arg4[%c256, %c0_31] : memref<320x128xbf16, #tpu.memory_space<vmem>>, vector<64x128xbf16>
    %cst_32 = arith.constant dense<0.000000e+00> : vector<2x128xf32>
    %55 = tpu.matmul %53, %54, %cst_32 {dimension_numbers = #tpu.dot_dimension_numbers<[1], [0], [0], [1], [0, 0, 1, 1], [], []>} : vector<2x64xbf16>, vector<64x128xbf16>, vector<2x128xf32> -> vector<2x128xf32>
    %56 = arith.addf %45, %55 : vector<2x128xf32>
    %c0_33 = arith.constant 0 : index
    %c0_34 = arith.constant 0 : index
    %57 = vector.load %arg5[%c0_33, %c0_34] : memref<1x128xf32, #tpu.memory_space<vmem>>, vector<1x128xf32>
    %58 = vector.broadcast %57 : vector<1x128xf32> to vector<2x128xf32>
    %59 = arith.addf %56, %58 : vector<2x128xf32>
    %cst_35 = arith.constant 0.000000e+00 : f32
    %60 = vector.broadcast %cst_35 : f32 to vector<2x128xf32>
    %61 = arith.maximumf %59, %60 : vector<2x128xf32>
    %62 = arith.truncf %61 : vector<2x128xf32> to vector<2x128xbf16>
    %c0_36 = arith.constant 0 : index
    %c0_37 = arith.constant 0 : index
    %63 = vector.load %arg6[%c0_36, %c0_37] : memref<128x128xbf16, #tpu.memory_space<vmem>>, vector<128x128xbf16>
    %cst_38 = arith.constant dense<0.000000e+00> : vector<2x128xf32>
    %64 = tpu.matmul %62, %63, %cst_38 {dimension_numbers = #tpu.dot_dimension_numbers<[1], [0], [0], [1], [0, 0, 1, 1], [], []>} : vector<2x128xbf16>, vector<128x128xbf16>, vector<2x128xf32> -> vector<2x128xf32>
    %c0_39 = arith.constant 0 : index
    %c0_40 = arith.constant 0 : index
    %65 = vector.load %arg7[%c0_39, %c0_40] : memref<1x128xf32, #tpu.memory_space<vmem>>, vector<1x128xf32>
    %66 = vector.broadcast %65 : vector<1x128xf32> to vector<2x128xf32>
    %67 = arith.addf %64, %66 : vector<2x128xf32>
    %c0_41 = arith.constant 0 : index
    %c0_42 = arith.constant 0 : index
    %68 = vector.load %arg8[%c0_41, %c0_42] : memref<2x128xf32, #tpu.memory_space<vmem>>, vector<2x128xf32>
    tpu.vector_store %arg8[%c0_41, %c0_42], %67 {strides = array<i32>} : memref<2x128xf32, #tpu.memory_space<vmem>>, vector<2x128xf32>,
    return
  }
  func.func @transform_0(%arg0: i32) -> (i32, i32) {
    %c0_i32 = arith.constant 0 : i32
    %c0_i32_0 = arith.constant 0 : i32
    return %arg0, %c0_i32 : i32, i32
  }
  func.func @transform_1(%arg0: i32) -> (i32, i32) {
    %c0_i32 = arith.constant 0 : i32
    %c0_i32_0 = arith.constant 0 : i32
    %c0_i32_1 = arith.constant 0 : i32
    return %c0_i32, %c0_i32_0 : i32, i32
  }
  func.func @transform_2(%arg0: i32) -> (i32, i32) {
    %c0_i32 = arith.constant 0 : i32
    %c0_i32_0 = arith.constant 0 : i32
    %c0_i32_1 = arith.constant 0 : i32
    return %c0_i32, %c0_i32_0 : i32, i32
  }
  func.func @transform_3(%arg0: i32) -> (i32, i32) {
    %c0_i32 = arith.constant 0 : i32
    %c0_i32_0 = arith.constant 0 : i32
    %c0_i32_1 = arith.constant 0 : i32
    return %c0_i32, %c0_i32_0 : i32, i32
  }
  func.func @transform_4(%arg0: i32) -> (i32, i32) {
    %c0_i32 = arith.constant 0 : i32
    %c0_i32_0 = arith.constant 0 : i32
    %c0_i32_1 = arith.constant 0 : i32
    return %c0_i32, %c0_i32_0 : i32, i32
  }
  func.func @transform_5(%arg0: i32) -> (i32, i32) {
    %c0_i32 = arith.constant 0 : i32
    %c0_i32_0 = arith.constant 0 : i32
    %c0_i32_1 = arith.constant 0 : i32
    return %c0_i32, %c0_i32_0 : i32, i32
  }
  func.func @transform_6(%arg0: i32) -> (i32, i32) {
    %c0_i32 = arith.constant 0 : i32
    %c0_i32_0 = arith.constant 0 : i32
    %c0_i32_1 = arith.constant 0 : i32
    return %c0_i32, %c0_i32_0 : i32, i32
  }
  func.func @transform_7(%arg0: i32) -> (i32, i32) {
    %c0_i32 = arith.constant 0 : i32
    %c0_i32_0 = arith.constant 0 : i32
    return %arg0, %c0_i32 : i32, i32
  }
}

</mosaic_0001>

<llo_original>
// kernel: a_call__.1
$region0: #{a_call__.1}
  #allocation0 [shape = 'u32[]', space=smem, size = 0x4, offset = 0x4, fixed_abs, tag = 'smem constant byte address 0x4 - core index']
  #allocation1 [shape = 'u32[144,128]{1,0:T(1,128)}', space=vmem, size = 0x12000, scoped, tag = 'internal scratch']
  %s0 = inlined_call_operand.vmem [shape: f32[2,2400], index: 0, kind: input, shape index: {}]
  %s1 = inlined_call_operand.hbm [shape: bf16[1600,64], index: 1, kind: input, shape index: {}]
  %s2 = inlined_call_operand.vmem [shape: f32[1,64], index: 2, kind: input, shape index: {}]
  %s3 = inlined_call_operand.vmem [shape: bf16[320,128], index: 3, kind: input, shape index: {}]
  %s4 = inlined_call_operand.vmem [shape: f32[1,128], index: 4, kind: input, shape index: {}]
  %s5 = inlined_call_operand.vmem [shape: bf16[128,128], index: 5, kind: input, shape index: {}]
  %s6 = inlined_call_operand.vmem [shape: f32[1,128], index: 6, kind: input, shape index: {}]
  %s7 = inlined_call_operand.hbm [shape: f32[2,128], index: 7, kind: output, shape index: {}]
  %s8 = sld [smem:[#allocation0]]
  $region42: #{a_call__.1} parent=0
    _
  %s10 = ssub.s32 1, %s8
  %s11 = scalar_select 0, %s10, %s8
  $region1: #{a_call__.1} parent=0
    #allocation2 [shape = 'u8[409600]{0}', space=vmem, size = 0x64000, scoped, tag = 'input window, operand 1, single buffered']
    #allocation3 [shape = 's32[1]{0}', space=sflag, size = 0x4, scoped, tag = 'scoped memory for a_call__.1']
    #allocation4 [shape = 's32[1]{0}', space=sflag, size = 0x4, scoped, tag = 'scoped memory for a_call__.1']
    #allocation5 [shape = 'u8[1024]{0}', space=vmem, size = 0x400, scoped, tag = 'output window, operand 0, single buffered']
    %12 = vsyncpa [#allocation3], 0
    %13 = vsyncpa [#allocation4], 0
    // Predicated region
    $region2: #{a_call__.1} parent=1 // pred_check
      _
    $region3: #{a_call__.1} parent=1 // pred_check_branch
      %15 = sbr.rel (0) target = $region5
    $region4: #{a_call__.1} parent=1 // pred_region
      _
    $region5: #{a_call__.1} parent=1 // pred_fallthru
      _
    // Predicated region
    $region6: #{a_call__.1} parent=1 // pred_check
      _
    $region7: #{a_call__.1} parent=1 // pred_check_branch
      %17 = sbr.rel (0) target = $region9
    $region8: #{a_call__.1} parent=1 // pred_region
      %s19 = ssub.s32 12800, 12800
      %20 = vsyncadd [#allocation3], %s19
      %s21 = sshll.u32 [#allocation2], 4
      %s22 = int_to_ptr.vmem [resolvable:$true] %s21
      %27 = dma.hbm_to_vmem [thread:$0]  %s1, 12800, %s22, [#allocation3], 64, 64, 4
    $region9: #{a_call__.1} parent=1 // pred_fallthru
      _
    // Predicated region
    $region10: #{a_call__.1} parent=1 // pred_check
      _
    $region11: #{a_call__.1} parent=1 // pred_check_branch
      %29 = sbr.rel (0) target = $region13
    $region12: #{a_call__.1} parent=1 // pred_region
      _
    $region13: #{a_call__.1} parent=1 // pred_fallthru
      _
    // Predicated region
    $region14: #{a_call__.1} parent=1 // pred_check
      _
    $region15: #{a_call__.1} parent=1 // pred_check_branch
      %31 = sbr.rel (0) target = $region17
    $region16: #{a_call__.1} parent=1 // pred_region
      _
    $region17: #{a_call__.1} parent=1 // pred_fallthru
      _
    // Predicated region
    $region18: #{a_call__.1} parent=1 // pred_check
      _
    $region19: #{a_call__.1} parent=1 // pred_check_branch
      %33 = sbr.rel (0) target = $region21
    $region20: #{a_call__.1} parent=1 // pred_region
      _
    $region21: #{a_call__.1} parent=1 // pred_fallthru
      _
    // Predicated region
    $region22: #{a_call__.1} parent=1 // pred_check
      _
    $region23: #{a_call__.1} parent=1 // pred_check_branch
      %35 = sbr.rel (0) target = $region25
    $region24: #{a_call__.1} parent=1 // pred_region
      _
    $region25: #{a_call__.1} parent=1 // pred_fallthru
      _
    // Predicated region
    $region26: #{a_call__.1} parent=1 // pred_check
      _
    $region27: #{a_call__.1} parent=1 // pred_check_branch
      %37 = sbr.rel (0) target = $region29
    $region28: #{a_call__.1} parent=1 // pred_region
      _
    $region29: #{a_call__.1} parent=1 // pred_fallthru
      _
    // Predicated region
    $region30: #{a_call__.1} parent=1 // pred_check
      _
    $region31: #{a_call__.1} parent=1 // pred_check_branch
      %39 = sbr.rel (0) target = $region33
    $region32: #{a_call__.1} parent=1 // pred_region
      %40 = dma.done [#allocation3], 12800
    $region33: #{a_call__.1} parent=1 // pred_fallthru
      _
    %v42 = vld [vmem:[%s0] sm:$0xff]
    %v43 = vld [vmem:[%s0 + $0x8] sm:$0xff]
    %v44 = vld [vmem:[%s0 + $0x10] sm:$0xff]
    %v45 = vld [vmem:[%s0 + $0x18] sm:$0xff]
    %v46 = vld [vmem:[%s0 + $0x20] sm:$0x3f]
    %v52 = vcombine.high %v42, %v42
    %v54 = vunpack.c.l.s4 1983009808
    %v55 = vunpack.c.0.s8 %v54
    %v56 = vlaneseq
    %v57 = vshrl.u32 %v56, 7
    %v58 = vsub.s32 %v55, %v57
    %v59 = vrot.slane %v42, %v58
    %v61 = vunpack.c.l.s4 1983009808
    %v62 = vunpack.c.0.s8 %v61
    %v63 = vlaneseq
    %v64 = vshrl.u32 %v63, 7
    %v65 = vsub.s32 %v62, %v64
    %v66 = vrot.slane %v52, %v65
    %v67 = vcombine.high %v59, %v59
    %v68 = vcombine.high %v66, %v66
    %v69 = vcombine.high %v43, %v43
    %v71 = vunpack.c.l.s4 1983009808
    %v72 = vunpack.c.0.s8 %v71
    %v73 = vlaneseq
    %v74 = vshrl.u32 %v73, 7
    %v75 = vsub.s32 %v72, %v74
    %v76 = vrot.slane %v43, %v75
    %v78 = vunpack.c.l.s4 1983009808
    %v79 = vunpack.c.0.s8 %v78
    %v80 = vlaneseq
    %v81 = vshrl.u32 %v80, 7
    %v82 = vsub.s32 %v79, %v81
    %v83 = vrot.slane %v69, %v82
    %v84 = vcombine.high %v76, %v76
    %v85 = vcombine.high %v83, %v83
    %v86 = vcombine.high %v44, %v44
    %v88 = vunpack.c.l.s4 1983009808
    %v89 = vunpack.c.0.s8 %v88
    %v90 = vlaneseq
    %v91 = vshrl.u32 %v90, 7
    %v92 = vsub.s32 %v89, %v91
    %v93 = vrot.slane %v44, %v92
    %v95 = vunpack.c.l.s4 1983009808
    %v96 = vunpack.c.0.s8 %v95
    %v97 = vlaneseq
    %v98 = vshrl.u32 %v97, 7
    %v99 = vsub.s32 %v96, %v98
    %v100 = vrot.slane %v86, %v99
    %v101 = vcombine.high %v93, %v93
    %v102 = vcombine.high %v100, %v100
    %v103 = vcombine.high %v45, %v45
    %v105 = vunpack.c.l.s4 1983009808
    %v106 = vunpack.c.0.s8 %v105
    %v107 = vlaneseq
    %v108 = vshrl.u32 %v107, 7
    %v109 = vsub.s32 %v106, %v108
    %v110 = vrot.slane %v45, %v109
    %v112 = vunpack.c.l.s4 1983009808
    %v113 = vunpack.c.0.s8 %v112
    %v114 = vlaneseq
    %v115 = vshrl.u32 %v114, 7
    %v116 = vsub.s32 %v113, %v115
    %v117 = vrot.slane %v103, %v116
    %v118 = vcombine.high %v110, %v110
    %v119 = vcombine.high %v117, %v117
    %v120 = vcombine.high %v46, %v46
    %v122 = vunpack.c.l.s4 1983009808
    %v123 = vunpack.c.0.s8 %v122
    %v124 = vlaneseq
    %v125 = vshrl.u32 %v124, 7
    %v126 = vsub.s32 %v123, %v125
    %v127 = vrot.slane %v46, %v126
    %v129 = vunpack.c.l.s4 1983009808
    %v130 = vunpack.c.0.s8 %v129
    %v131 = vlaneseq
    %v132 = vshrl.u32 %v131, 7
    %v133 = vsub.s32 %v130, %v132
    %v134 = vrot.slane %v120, %v133
    %v135 = vcombine.high %v127, %v127
    %v155 = vpack.c.bf16 %v59, %v59
    %v156 = vpack.c.bf16 %v67, %v67
    %v157 = vpack.c.bf16 %v66, %v66
    %v158 = vpack.c.bf16 %v68, %v68
    %v159 = vpack.c.bf16 %v76, %v76
    %v160 = vpack.c.bf16 %v84, %v84
    %v161 = vpack.c.bf16 %v83, %v83
    %v162 = vpack.c.bf16 %v85, %v85
    %v163 = vpack.c.bf16 %v93, %v93
    %v164 = vpack.c.bf16 %v101, %v101
    %v165 = vpack.c.bf16 %v100, %v100
    %v166 = vpack.c.bf16 %v102, %v102
    %v167 = vpack.c.bf16 %v110, %v110
    %v168 = vpack.c.bf16 %v118, %v118
    %v169 = vpack.c.bf16 %v117, %v117
    %v170 = vpack.c.bf16 %v119, %v119
    %v171 = vpack.c.bf16 %v127, %v127
    %v172 = vpack.c.bf16 %v135, %v135
    %v173 = vpack.c.bf16 %v134, %v134
    %v174 = vld [vmem:[%s2] sm:$0x1]
    %v175 = vld [vmem:[#allocation2] sm:$0xf]
    %v176 = vld [vmem:[#allocation2 + $0x4] sm:$0xf]
    %v177 = vld [vmem:[#allocation2 + $0x8] sm:$0xf]
    %v178 = vld [vmem:[#allocation2 + $0xc] sm:$0xf]
    %v179 = vld [vmem:[#allocation2 + $0x10] sm:$0xf]
    %v180 = vld [vmem:[#allocation2 + $0x14] sm:$0xf]
    %v181 = vld [vmem:[#allocation2 + $0x18] sm:$0xf]
    %v182 = vld [vmem:[#allocation2 + $0x1c] sm:$0xf]
    %v183 = vld [vmem:[#allocation2 + $0x20] sm:$0xf]
    %v184 = vld [vmem:[#allocation2 + $0x24] sm:$0xf]
    %v185 = vld [vmem:[#allocation2 + $0x28] sm:$0xf]
    %v186 = vld [vmem:[#allocation2 + $0x2c] sm:$0xf]
    %v187 = vld [vmem:[#allocation2 + $0x30] sm:$0xf]
    %v188 = vld [vmem:[#allocation2 + $0x34] sm:$0xf]
    %v189 = vld [vmem:[#allocation2 + $0x38] sm:$0xf]
    %v190 = vld [vmem:[#allocation2 + $0x3c] sm:$0xf]
    %v191 = vld [vmem:[#allocation2 + $0x40] sm:$0xf]
    %v192 = vld [vmem:[#allocation2 + $0x44] sm:$0xf]
    %v193 = vld [vmem:[#allocation2 + $0x48] sm:$0xf]
    %v194 = vld [vmem:[#allocation2 + $0x4c] sm:$0xf]
    %v195 = vld [vmem:[#allocation2 + $0x50] sm:$0xf]
    %v196 = vld [vmem:[#allocation2 + $0x54] sm:$0xf]
    %v197 = vld [vmem:[#allocation2 + $0x58] sm:$0xf]
    %v198 = vld [vmem:[#allocation2 + $0x5c] sm:$0xf]
    %v199 = vld [vmem:[#allocation2 + $0x60] sm:$0xf]
    %v200 = vld [vmem:[#allocation2 + $0x64] sm:$0xf]
    %v201 = vld [vmem:[#allocation2 + $0x68] sm:$0xf]
    %v202 = vld [vmem:[#allocation2 + $0x6c] sm:$0xf]
    %v203 = vld [vmem:[#allocation2 + $0x70] sm:$0xf]
    %v204 = vld [vmem:[#allocation2 + $0x74] sm:$0xf]
    %v205 = vld [vmem:[#allocation2 + $0x78] sm:$0xf]
    %v206 = vld [vmem:[#allocation2 + $0x7c] sm:$0xf]
    %v207 = vld [vmem:[#allocation2 + $0x80] sm:$0xf]
    %v208 = vld [vmem:[#allocation2 + $0x84] sm:$0xf]
    %v209 = vld [vmem:[#allocation2 + $0x88] sm:$0xf]
    %v210 = vld [vmem:[#allocation2 + $0x8c] sm:$0xf]
    %v211 = vld [vmem:[#allocation2 + $0x90] sm:$0xf]
    %v212 = vld [vmem:[#allocation2 + $0x94] sm:$0xf]
    %v213 = vld [vmem:[#allocation2 + $0x98] sm:$0xf]
    %v214 = vld [vmem:[#allocation2 + $0x9c] sm:$0xf]
    %v215 = vld [vmem:[#allocation2 + $0xa0] sm:$0xf]
    %v216 = vld [vmem:[#allocation2 + $0xa4] sm:$0xf]
    %v217 = vld [vmem:[#allocation2 + $0xa8] sm:$0xf]
    %v218 = vld [vmem:[#allocation2 + $0xac] sm:$0xf]
    %v219 = vld [vmem:[#allocation2 + $0xb0] sm:$0xf]
    %v220 = vld [vmem:[#allocation2 + $0xb4] sm:$0xf]
    %v221 = vld [vmem:[#allocation2 + $0xb8] sm:$0xf]
    %v222 = vld [vmem:[#allocation2 + $0xbc] sm:$0xf]
    %v223 = vld [vmem:[#allocation2 + $0xc0] sm:$0xf]
    %v224 = vld [vmem:[#allocation2 + $0xc4] sm:$0xf]
    %v225 = vld [vmem:[#allocation2 + $0xc8] sm:$0xf]
    %v226 = vld [vmem:[#allocation2 + $0xcc] sm:$0xf]
    %v227 = vld [vmem:[#allocation2 + $0xd0] sm:$0xf]
    %v228 = vld [vmem:[#allocation2 + $0xd4] sm:$0xf]
    %v229 = vld [vmem:[#allocation2 + $0xd8] sm:$0xf]
    %v230 = vld [vmem:[#allocation2 + $0xdc] sm:$0xf]
    %v231 = vld [vmem:[#allocation2 + $0xe0] sm:$0xf]
    %v232 = vld [vmem:[#allocation2 + $0xe4] sm:$0xf]
    %v233 = vld [vmem:[#allocation2 + $0xe8] sm:$0xf]
    %v234 = vld [vmem:[#allocation2 + $0xec] sm:$0xf]
    %v235 = vld [vmem:[#allocation2 + $0xf0] sm:$0xf]
    %v236 = vld [vmem:[#allocation2 + $0xf4] sm:$0xf]
    %v237 = vld [vmem:[#allocation2 + $0xf8] sm:$0xf]
    %v238 = vld [vmem:[#allocation2 + $0xfc] sm:$0xf]
    %v239 = vld [vmem:[#allocation2 + $0x100] sm:$0xf]
    %v240 = vld [vmem:[#allocation2 + $0x104] sm:$0xf]
    %v241 = vld [vmem:[#allocation2 + $0x108] sm:$0xf]
    %v242 = vld [vmem:[#allocation2 + $0x10c] sm:$0xf]
    %v243 = vld [vmem:[#allocation2 + $0x110] sm:$0xf]
    %v244 = vld [vmem:[#allocation2 + $0x114] sm:$0xf]
    %v245 = vld [vmem:[#allocation2 + $0x118] sm:$0xf]
    %v246 = vld [vmem:[#allocation2 + $0x11c] sm:$0xf]
    %v247 = vld [vmem:[#allocation2 + $0x120] sm:$0xf]
    %v248 = vld [vmem:[#allocation2 + $0x124] sm:$0xf]
    %v249 = vld [vmem:[#allocation2 + $0x128] sm:$0xf]
    %v250 = vld [vmem:[#allocation2 + $0x12c] sm:$0xf]
    %v251 = vld [vmem:[#allocation2 + $0x130] sm:$0xf]
    %v252 = vld [vmem:[#allocation2 + $0x134] sm:$0xf]
    %v253 = vld [vmem:[#allocation2 + $0x138] sm:$0xf]
    %v254 = vld [vmem:[#allocation2 + $0x13c] sm:$0xf]
    %v255 = vld [vmem:[#allocation2 + $0x140] sm:$0xf]
    %v256 = vld [vmem:[#allocation2 + $0x144] sm:$0xf]
    %v257 = vld [vmem:[#allocation2 + $0x148] sm:$0xf]
    %v258 = vld [vmem:[#allocation2 + $0x14c] sm:$0xf]
    %v259 = vld [vmem:[#allocation2 + $0x150] sm:$0xf]
    %v260 = vld [vmem:[#allocation2 + $0x154] sm:$0xf]
    %v261 = vld [vmem:[#allocation2 + $0x158] sm:$0xf]
    %v262 = vld [vmem:[#allocation2 + $0x15c] sm:$0xf]
    %v263 = vld [vmem:[#allocation2 + $0x160] sm:$0xf]
    %v264 = vld [vmem:[#allocation2 + $0x164] sm:$0xf]
    %v265 = vld [vmem:[#allocation2 + $0x168] sm:$0xf]
    %v266 = vld [vmem:[#allocation2 + $0x16c] sm:$0xf]
    %v267 = vld [vmem:[#allocation2 + $0x170] sm:$0xf]
    %v268 = vld [vmem:[#allocation2 + $0x174] sm:$0xf]
    %v269 = vld [vmem:[#allocation2 + $0x178] sm:$0xf]
    %v270 = vld [vmem:[#allocation2 + $0x17c] sm:$0xf]
    %v271 = vld [vmem:[#allocation2 + $0x180] sm:$0xf]
    %v272 = vld [vmem:[#allocation2 + $0x184] sm:$0xf]
    %v273 = vld [vmem:[#allocation2 + $0x188] sm:$0xf]
    %v274 = vld [vmem:[#allocation2 + $0x18c] sm:$0xf]
    %v275 = vld [vmem:[#allocation2 + $0x190] sm:$0xf]
    %v276 = vld [vmem:[#allocation2 + $0x194] sm:$0xf]
    %v277 = vld [vmem:[#allocation2 + $0x198] sm:$0xf]
    %v278 = vld [vmem:[#allocation2 + $0x19c] sm:$0xf]
    %v279 = vld [vmem:[#allocation2 + $0x1a0] sm:$0xf]
    %v280 = vld [vmem:[#allocation2 + $0x1a4] sm:$0xf]
    %v281 = vld [vmem:[#allocation2 + $0x1a8] sm:$0xf]
    %v282 = vld [vmem:[#allocation2 + $0x1ac] sm:$0xf]
    %v283 = vld [vmem:[#allocation2 + $0x1b0] sm:$0xf]
    %v284 = vld [vmem:[#allocation2 + $0x1b4] sm:$0xf]
    %v285 = vld [vmem:[#allocation2 + $0x1b8] sm:$0xf]
    %v286 = vld [vmem:[#allocation2 + $0x1bc] sm:$0xf]
    %v287 = vld [vmem:[#allocation2 + $0x1c0] sm:$0xf]
    %v288 = vld [vmem:[#allocation2 + $0x1c4] sm:$0xf]
    %v289 = vld [vmem:[#allocation2 + $0x1c8] sm:$0xf]
    %v290 = vld [vmem:[#allocation2 + $0x1cc] sm:$0xf]
    %v291 = vld [vmem:[#allocation2 + $0x1d0] sm:$0xf]
    %v292 = vld [vmem:[#allocation2 + $0x1d4] sm:$0xf]
    %v293 = vld [vmem:[#allocation2 + $0x1d8] sm:$0xf]
    %v294 = vld [vmem:[#allocation2 + $0x1dc] sm:$0xf]
    %v295 = vld [vmem:[#allocation2 + $0x1e0] sm:$0xf]
    %v296 = vld [vmem:[#allocation2 + $0x1e4] sm:$0xf]
    %v297 = vld [vmem:[#allocation2 + $0x1e8] sm:$0xf]
    %v298 = vld [vmem:[#allocation2 + $0x1ec] sm:$0xf]
    %v299 = vld [vmem:[#allocation2 + $0x1f0] sm:$0xf]
    %v300 = vld [vmem:[#allocation2 + $0x1f4] sm:$0xf]
    %v301 = vld [vmem:[#allocation2 + $0x1f8] sm:$0xf]
    %v302 = vld [vmem:[#allocation2 + $0x1fc] sm:$0xf]
    %v303 = vld [vmem:[#allocation2 + $0x200] sm:$0xf]
    %v304 = vld [vmem:[#allocation2 + $0x204] sm:$0xf]
    %v305 = vld [vmem:[#allocation2 + $0x208] sm:$0xf]
    %v306 = vld [vmem:[#allocation2 + $0x20c] sm:$0xf]
    %v307 = vld [vmem:[#allocation2 + $0x210] sm:$0xf]
    %v308 = vld [vmem:[#allocation2 + $0x214] sm:$0xf]
    %v309 = vld [vmem:[#allocation2 + $0x218] sm:$0xf]
    %v310 = vld [vmem:[#allocation2 + $0x21c] sm:$0xf]
    %v311 = vld [vmem:[#allocation2 + $0x220] sm:$0xf]
    %v312 = vld [vmem:[#allocation2 + $0x224] sm:$0xf]
    %v313 = vld [vmem:[#allocation2 + $0x228] sm:$0xf]
    %v314 = vld [vmem:[#allocation2 + $0x22c] sm:$0xf]
    %v315 = vld [vmem:[#allocation2 + $0x230] sm:$0xf]
    %v316 = vld [vmem:[#allocation2 + $0x234] sm:$0xf]
    %v317 = vld [vmem:[#allocation2 + $0x238] sm:$0xf]
    %v318 = vld [vmem:[#allocation2 + $0x23c] sm:$0xf]
    %v319 = vld [vmem:[#allocation2 + $0x240] sm:$0xf]
    %v320 = vld [vmem:[#allocation2 + $0x244] sm:$0xf]
    %v321 = vld [vmem:[#allocation2 + $0x248] sm:$0xf]
    %v322 = vld [vmem:[#allocation2 + $0x24c] sm:$0xf]
    %v323 = vld [vmem:[#allocation2 + $0x250] sm:$0xf]
    %v324 = vld [vmem:[#allocation2 + $0x254] sm:$0xf]
    %v325 = vld [vmem:[#allocation2 + $0x258] sm:$0xf]
    %v326 = vld [vmem:[#allocation2 + $0x25c] sm:$0xf]
    %v327 = vld [vmem:[#allocation2 + $0x260] sm:$0xf]
    %v328 = vld [vmem:[#allocation2 + $0x264] sm:$0xf]
    %v329 = vld [vmem:[#allocation2 + $0x268] sm:$0xf]
    %v330 = vld [vmem:[#allocation2 + $0x26c] sm:$0xf]
    %v331 = vld [vmem:[#allocation2 + $0x270] sm:$0xf]
    %v332 = vld [vmem:[#allocation2 + $0x274] sm:$0xf]
    %v333 = vld [vmem:[#allocation2 + $0x278] sm:$0xf]
    %v334 = vld [vmem:[#allocation2 + $0x27c] sm:$0xf]
    %v335 = vld [vmem:[#allocation2 + $0x280] sm:$0xf]
    %v336 = vld [vmem:[#allocation2 + $0x284] sm:$0xf]
    %v337 = vld [vmem:[#allocation2 + $0x288] sm:$0xf]
    %v338 = vld [vmem:[#allocation2 + $0x28c] sm:$0xf]
    %v339 = vld [vmem:[#allocation2 + $0x290] sm:$0xf]
    %v340 = vld [vmem:[#allocation2 + $0x294] sm:$0xf]
    %v341 = vld [vmem:[#allocation2 + $0x298] sm:$0xf]
    %v342 = vld [vmem:[#allocation2 + $0x29c] sm:$0xf]
    %v343 = vld [vmem:[#allocation2 + $0x2a0] sm:$0xf]
    %v344 = vld [vmem:[#allocation2 + $0x2a4] sm:$0xf]
    %v345 = vld [vmem:[#allocation2 + $0x2a8] sm:$0xf]
    %v346 = vld [vmem:[#allocation2 + $0x2ac] sm:$0xf]
    %v347 = vld [vmem:[#allocation2 + $0x2b0] sm:$0xf]
    %v348 = vld [vmem:[#allocation2 + $0x2b4] sm:$0xf]
    %v349 = vld [vmem:[#allocation2 + $0x2b8] sm:$0xf]
    %v350 = vld [vmem:[#allocation2 + $0x2bc] sm:$0xf]
    %v351 = vld [vmem:[#allocation2 + $0x2c0] sm:$0xf]
    %v352 = vld [vmem:[#allocation2 + $0x2c4] sm:$0xf]
    %v353 = vld [vmem:[#allocation2 + $0x2c8] sm:$0xf]
    %v354 = vld [vmem:[#allocation2 + $0x2cc] sm:$0xf]
    %v355 = vld [vmem:[#allocation2 + $0x2d0] sm:$0xf]
    %v356 = vld [vmem:[#allocation2 + $0x2d4] sm:$0xf]
    %v357 = vld [vmem:[#allocation2 + $0x2d8] sm:$0xf]
    %v358 = vld [vmem:[#allocation2 + $0x2dc] sm:$0xf]
    %v359 = vld [vmem:[#allocation2 + $0x2e0] sm:$0xf]
    %v360 = vld [vmem:[#allocation2 + $0x2e4] sm:$0xf]
    %v361 = vld [vmem:[#allocation2 + $0x2e8] sm:$0xf]
    %v362 = vld [vmem:[#allocation2 + $0x2ec] sm:$0xf]
    %v363 = vld [vmem:[#allocation2 + $0x2f0] sm:$0xf]
    %v364 = vld [vmem:[#allocation2 + $0x2f4] sm:$0xf]
    %v365 = vld [vmem:[#allocation2 + $0x2f8] sm:$0xf]
    %v366 = vld [vmem:[#allocation2 + $0x2fc] sm:$0xf]
    %v367 = vld [vmem:[#allocation2 + $0x300] sm:$0xf]
    %v368 = vld [vmem:[#allocation2 + $0x304] sm:$0xf]
    %v369 = vld [vmem:[#allocation2 + $0x308] sm:$0xf]
    %v370 = vld [vmem:[#allocation2 + $0x30c] sm:$0xf]
    %v371 = vld [vmem:[#allocation2 + $0x310] sm:$0xf]
    %v372 = vld [vmem:[#allocation2 + $0x314] sm:$0xf]
    %v373 = vld [vmem:[#allocation2 + $0x318] sm:$0xf]
    %v374 = vld [vmem:[#allocation2 + $0x31c] sm:$0xf]
    %v376 = vlaneseq
    %v377 = vshrl.u32 %v376, 7
    %v378 = vsub.s32 0, %v377
    %v379 = vrot.slane %v174, %v378
    %v581 = vunpack.c.l.b16 %v175
    %v582 = vunpack.c.l.b16 %v176
    %v583 = vunpack.c.l.b16 %v177
    %v584 = vunpack.c.l.b16 %v178
    %v585 = vunpack.c.l.b16 %v179
    %v586 = vunpack.c.l.b16 %v180
    %v587 = vunpack.c.l.b16 %v181
    %v588 = vunpack.c.l.b16 %v182
    %v589 = vunpack.c.l.b16 %v183
    %v590 = vunpack.c.l.b16 %v184
    %v591 = vunpack.c.l.b16 %v185
    %v592 = vunpack.c.l.b16 %v186
    %v593 = vunpack.c.l.b16 %v187
    %v594 = vunpack.c.l.b16 %v188
    %v595 = vunpack.c.l.b16 %v189
    %v596 = vunpack.c.l.b16 %v190
    %v597 = vunpack.c.l.b16 %v191
    %v598 = vunpack.c.l.b16 %v192
    %v599 = vunpack.c.l.b16 %v193
    %v600 = vunpack.c.l.b16 %v194
    %v601 = vunpack.c.l.b16 %v195
    %v602 = vunpack.c.l.b16 %v196
    %v603 = vunpack.c.l.b16 %v197
    %v604 = vunpack.c.l.b16 %v198
    %v605 = vunpack.c.l.b16 %v199
    %v606 = vunpack.c.l.b16 %v200
    %v607 = vunpack.c.l.b16 %v201
    %v608 = vunpack.c.l.b16 %v202
    %v609 = vunpack.c.l.b16 %v203
    %v610 = vunpack.c.l.b16 %v204
    %v611 = vunpack.c.l.b16 %v205
    %v612 = vunpack.c.l.b16 %v206
    %v613 = vunpack.c.l.b16 %v207
    %v614 = vunpack.c.l.b16 %v208
    %v615 = vunpack.c.l.b16 %v209
    %v616 = vunpack.c.l.b16 %v210
    %v617 = vunpack.c.l.b16 %v211
    %v618 = vunpack.c.l.b16 %v212
    %v619 = vunpack.c.l.b16 %v213
    %v620 = vunpack.c.l.b16 %v214
    %v621 = vunpack.c.l.b16 %v215
    %v622 = vunpack.c.l.b16 %v216
    %v623 = vunpack.c.l.b16 %v217
    %v624 = vunpack.c.l.b16 %v218
    %v625 = vunpack.c.l.b16 %v219
    %v626 = vunpack.c.l.b16 %v220
    %v627 = vunpack.c.l.b16 %v221
    %v628 = vunpack.c.l.b16 %v222
    %v629 = vunpack.c.l.b16 %v223
    %v630 = vunpack.c.l.b16 %v224
    %v631 = vunpack.c.l.b16 %v225
    %v632 = vunpack.c.l.b16 %v226
    %v633 = vunpack.c.l.b16 %v227
    %v634 = vunpack.c.l.b16 %v228
    %v635 = vunpack.c.l.b16 %v229
    %v636 = vunpack.c.l.b16 %v230
    %v637 = vunpack.c.l.b16 %v231
    %v638 = vunpack.c.l.b16 %v232
    %v639 = vunpack.c.l.b16 %v233
    %v640 = vunpack.c.l.b16 %v234
    %v641 = vunpack.c.l.b16 %v235
    %v642 = vunpack.c.l.b16 %v236
    %v643 = vunpack.c.l.b16 %v237
    %v644 = vunpack.c.l.b16 %v238
    %v645 = vunpack.c.l.b16 %v239
    %v646 = vunpack.c.l.b16 %v240
    %v647 = vunpack.c.l.b16 %v241
    %v648 = vunpack.c.l.b16 %v242
    %v649 = vunpack.c.l.b16 %v243
    %v650 = vunpack.c.l.b16 %v244
    %v651 = vunpack.c.l.b16 %v245
    %v652 = vunpack.c.l.b16 %v246
    %v653 = vunpack.c.l.b16 %v247
    %v654 = vunpack.c.l.b16 %v248
    %v655 = vunpack.c.l.b16 %v249
    %v656 = vunpack.c.l.b16 %v250
    %v657 = vunpack.c.l.b16 %v251
    %v658 = vunpack.c.l.b16 %v252
    %v659 = vunpack.c.l.b16 %v253
    %v660 = vunpack.c.l.b16 %v254
    %v661 = vunpack.c.l.b16 %v255
    %v662 = vunpack.c.l.b16 %v256
    %v663 = vunpack.c.l.b16 %v257
    %v664 = vunpack.c.l.b16 %v258
    %v665 = vunpack.c.l.b16 %v259
    %v666 = vunpack.c.l.b16 %v260
    %v667 = vunpack.c.l.b16 %v261
    %v668 = vunpack.c.l.b16 %v262
    %v669 = vunpack.c.l.b16 %v263
    %v670 = vunpack.c.l.b16 %v264
    %v671 = vunpack.c.l.b16 %v265
    %v672 = vunpack.c.l.b16 %v266
    %v673 = vunpack.c.l.b16 %v267
    %v674 = vunpack.c.l.b16 %v268
    %v675 = vunpack.c.l.b16 %v269
    %v676 = vunpack.c.l.b16 %v270
    %v677 = vunpack.c.l.b16 %v271
    %v678 = vunpack.c.l.b16 %v272
    %v679 = vunpack.c.l.b16 %v273
    %v680 = vunpack.c.l.b16 %v274
    %v681 = vunpack.c.l.b16 %v275
    %v682 = vunpack.c.l.b16 %v276
    %v683 = vunpack.c.l.b16 %v277
    %v684 = vunpack.c.l.b16 %v278
    %v685 = vunpack.c.l.b16 %v279
    %v686 = vunpack.c.l.b16 %v280
    %v687 = vunpack.c.l.b16 %v281
    %v688 = vunpack.c.l.b16 %v282
    %v689 = vunpack.c.l.b16 %v283
    %v690 = vunpack.c.l.b16 %v284
    %v691 = vunpack.c.l.b16 %v285
    %v692 = vunpack.c.l.b16 %v286
    %v693 = vunpack.c.l.b16 %v287
    %v694 = vunpack.c.l.b16 %v288
    %v695 = vunpack.c.l.b16 %v289
    %v696 = vunpack.c.l.b16 %v290
    %v697 = vunpack.c.l.b16 %v291
    %v698 = vunpack.c.l.b16 %v292
    %v699 = vunpack.c.l.b16 %v293
    %v700 = vunpack.c.l.b16 %v294
    %v701 = vunpack.c.l.b16 %v295
    %v702 = vunpack.c.l.b16 %v296
    %v703 = vunpack.c.l.b16 %v297
    %v704 = vunpack.c.l.b16 %v298
    %v705 = vunpack.c.l.b16 %v299
    %v706 = vunpack.c.l.b16 %v300
    %v707 = vunpack.c.l.b16 %v301
    %v708 = vunpack.c.l.b16 %v302
    %v709 = vunpack.c.l.b16 %v303
    %v710 = vunpack.c.l.b16 %v304
    %v711 = vunpack.c.l.b16 %v305
    %v712 = vunpack.c.l.b16 %v306
    %v713 = vunpack.c.l.b16 %v307
    %v714 = vunpack.c.l.b16 %v308
    %v715 = vunpack.c.l.b16 %v309
    %v716 = vunpack.c.l.b16 %v310
    %v717 = vunpack.c.l.b16 %v311
    %v718 = vunpack.c.l.b16 %v312
    %v719 = vunpack.c.l.b16 %v313
    %v720 = vunpack.c.l.b16 %v314
    %v721 = vunpack.c.l.b16 %v315
    %v722 = vunpack.c.l.b16 %v316
    %v723 = vunpack.c.l.b16 %v317
    %v724 = vunpack.c.l.b16 %v318
    %v725 = vunpack.c.l.b16 %v319
    %v726 = vunpack.c.l.b16 %v320
    %v727 = vunpack.c.l.b16 %v321
    %v728 = vunpack.c.l.b16 %v322
    %v729 = vunpack.c.l.b16 %v323
    %v730 = vunpack.c.l.b16 %v324
    %v731 = vunpack.c.l.b16 %v325
    %v732 = vunpack.c.l.b16 %v326
    %v733 = vunpack.c.l.b16 %v327
    %v734 = vunpack.c.l.b16 %v328
    %v735 = vunpack.c.l.b16 %v329
    %v736 = vunpack.c.l.b16 %v330
    %v737 = vunpack.c.l.b16 %v331
    %v738 = vunpack.c.l.b16 %v332
    %v739 = vunpack.c.l.b16 %v333
    %v740 = vunpack.c.l.b16 %v334
    %v741 = vunpack.c.l.b16 %v335
    %v742 = vunpack.c.l.b16 %v336
    %v743 = vunpack.c.l.b16 %v337
    %v744 = vunpack.c.l.b16 %v338
    %v745 = vunpack.c.l.b16 %v339
    %v746 = vunpack.c.l.b16 %v340
    %v747 = vunpack.c.l.b16 %v341
    %v748 = vunpack.c.l.b16 %v342
    %v749 = vunpack.c.l.b16 %v343
    %v750 = vunpack.c.l.b16 %v344
    %v751 = vunpack.c.l.b16 %v345
    %v752 = vunpack.c.l.b16 %v346
    %v753 = vunpack.c.l.b16 %v347
    %v754 = vunpack.c.l.b16 %v348
    %v755 = vunpack.c.l.b16 %v349
    %v756 = vunpack.c.l.b16 %v350
    %v757 = vunpack.c.l.b16 %v351
    %v758 = vunpack.c.l.b16 %v352
    %v759 = vunpack.c.l.b16 %v353
    %v760 = vunpack.c.l.b16 %v354
    %v761 = vunpack.c.l.b16 %v355
    %v762 = vunpack.c.l.b16 %v356
    %v763 = vunpack.c.l.b16 %v357
    %v764 = vunpack.c.l.b16 %v358
    %v765 = vunpack.c.l.b16 %v359
    %v766 = vunpack.c.l.b16 %v360
    %v767 = vunpack.c.l.b16 %v361
    %v768 = vunpack.c.l.b16 %v362
    %v769 = vunpack.c.l.b16 %v363
    %v770 = vunpack.c.l.b16 %v364
    %v771 = vunpack.c.l.b16 %v365
    %v772 = vunpack.c.l.b16 %v366
    %v773 = vunpack.c.l.b16 %v367
    %v774 = vunpack.c.l.b16 %v368
    %v775 = vunpack.c.l.b16 %v369
    %v776 = vunpack.c.l.b16 %v370
    %v777 = vunpack.c.l.b16 %v371
    %v778 = vunpack.c.l.b16 %v372
    %v779 = vunpack.c.l.b16 %v373
    %v780 = vunpack.c.l.b16 %v374
    %v781 = vpack.c.b16 %v582, %v581
    %v782 = vpack.c.b16 %v584, %v583
    %v783 = vpack.c.b16 %v586, %v585
    %v784 = vpack.c.b16 %v588, %v587
    %v785 = vpack.c.b16 %v590, %v589
    %v786 = vpack.c.b16 %v592, %v591
    %v787 = vpack.c.b16 %v594, %v593
    %v788 = vpack.c.b16 %v596, %v595
    %v789 = vpack.c.b16 %v598, %v597
    %v790 = vpack.c.b16 %v600, %v599
    %v791 = vpack.c.b16 %v602, %v601
    %v792 = vpack.c.b16 %v604, %v603
    %v793 = vpack.c.b16 %v606, %v605
    %v794 = vpack.c.b16 %v608, %v607
    %v795 = vpack.c.b16 %v610, %v609
    %v796 = vpack.c.b16 %v612, %v611
    %v797 = vpack.c.b16 %v614, %v613
    %v798 = vpack.c.b16 %v616, %v615
    %v799 = vpack.c.b16 %v618, %v617
    %v800 = vpack.c.b16 %v620, %v619
    %v801 = vpack.c.b16 %v622, %v621
    %v802 = vpack.c.b16 %v624, %v623
    %v803 = vpack.c.b16 %v626, %v625
    %v804 = vpack.c.b16 %v628, %v627
    %v805 = vpack.c.b16 %v630, %v629
    %v806 = vpack.c.b16 %v632, %v631
    %v807 = vpack.c.b16 %v634, %v633
    %v808 = vpack.c.b16 %v636, %v635
    %v809 = vpack.c.b16 %v638, %v637
    %v810 = vpack.c.b16 %v640, %v639
    %v811 = vpack.c.b16 %v642, %v641
    %v812 = vpack.c.b16 %v644, %v643
    %v813 = vpack.c.b16 %v646, %v645
    %v814 = vpack.c.b16 %v648, %v647
    %v815 = vpack.c.b16 %v650, %v649
    %v816 = vpack.c.b16 %v652, %v651
    %v817 = vpack.c.b16 %v654, %v653
    %v818 = vpack.c.b16 %v656, %v655
    %v819 = vpack.c.b16 %v658, %v657
    %v820 = vpack.c.b16 %v660, %v659
    %v821 = vpack.c.b16 %v662, %v661
    %v822 = vpack.c.b16 %v664, %v663
    %v823 = vpack.c.b16 %v666, %v665
    %v824 = vpack.c.b16 %v668, %v667
    %v825 = vpack.c.b16 %v670, %v669
    %v826 = vpack.c.b16 %v672, %v671
    %v827 = vpack.c.b16 %v674, %v673
    %v828 = vpack.c.b16 %v676, %v675
    %v829 = vpack.c.b16 %v678, %v677
    %v830 = vpack.c.b16 %v680, %v679
    %v831 = vpack.c.b16 %v682, %v681
    %v832 = vpack.c.b16 %v684, %v683
    %v833 = vpack.c.b16 %v686, %v685
    %v834 = vpack.c.b16 %v688, %v687
    %v835 = vpack.c.b16 %v690, %v689
    %v836 = vpack.c.b16 %v692, %v691
    %v837 = vpack.c.b16 %v694, %v693
    %v838 = vpack.c.b16 %v696, %v695
    %v839 = vpack.c.b16 %v698, %v697
    %v840 = vpack.c.b16 %v700, %v699
    %v841 = vpack.c.b16 %v702, %v701
    %v842 = vpack.c.b16 %v704, %v703
    %v843 = vpack.c.b16 %v706, %v705
    %v844 = vpack.c.b16 %v708, %v707
    %v845 = vpack.c.b16 %v710, %v709
    %v846 = vpack.c.b16 %v712, %v711
    %v847 = vpack.c.b16 %v714, %v713
    %v848 = vpack.c.b16 %v716, %v715
    %v849 = vpack.c.b16 %v718, %v717
    %v850 = vpack.c.b16 %v720, %v719
    %v851 = vpack.c.b16 %v722, %v721
    %v852 = vpack.c.b16 %v724, %v723
    %v853 = vpack.c.b16 %v726, %v725
    %v854 = vpack.c.b16 %v728, %v727
    %v855 = vpack.c.b16 %v730, %v729
    %v856 = vpack.c.b16 %v732, %v731
    %v857 = vpack.c.b16 %v734, %v733
    %v858 = vpack.c.b16 %v736, %v735
    %v859 = vpack.c.b16 %v738, %v737
    %v860 = vpack.c.b16 %v740, %v739
    %v861 = vpack.c.b16 %v742, %v741
    %v862 = vpack.c.b16 %v744, %v743
    %v863 = vpack.c.b16 %v746, %v745
    %v864 = vpack.c.b16 %v748, %v747
    %v865 = vpack.c.b16 %v750, %v749
    %v866 = vpack.c.b16 %v752, %v751
    %v867 = vpack.c.b16 %v754, %v753
    %v868 = vpack.c.b16 %v756, %v755
    %v869 = vpack.c.b16 %v758, %v757
    %v870 = vpack.c.b16 %v760, %v759
    %v871 = vpack.c.b16 %v762, %v761
    %v872 = vpack.c.b16 %v764, %v763
    %v873 = vpack.c.b16 %v766, %v765
    %v874 = vpack.c.b16 %v768, %v767
    %v875 = vpack.c.b16 %v770, %v769
    %v876 = vpack.c.b16 %v772, %v771
    %v877 = vpack.c.b16 %v774, %v773
    %v878 = vpack.c.b16 %v776, %v775
    %v879 = vpack.c.b16 %v778, %v777
    %v880 = vpack.c.b16 %v780, %v779
    %vm981 = vcmask 523264
    %v983 = vsel %vm981, %v167, 0
    %985 = vmatprep.subr.bf16.mxu0 0
    %986 = vmatpush1.bf16.msra.mxu0 %v781
    %987 = vmatprep.subr.bf16.mxu0 0
    %988 = vmatpush1.bf16.msra.mxu0 %v782
    %989 = vmatprep.subr.bf16.mxu0 0
    %990 = vmatpush1.bf16.msra.mxu0 %v783
    %991 = vmatprep.subr.bf16.mxu0 0
    %992 = vmatpush1.bf16.msra.mxu0 %v784
    %993 = vmatprep.subr.bf16.mxu0 0
    %994 = vmatpush1.bf16.msra.mxu0 %v785
    %995 = vmatprep.subr.bf16.mxu0 0
    %996 = vmatpush1.bf16.msra.mxu0 %v786
    %997 = vmatprep.subr.bf16.mxu0 0
    %998 = vmatpush1.bf16.msra.mxu0 %v787
    %999 = vmatprep.subr.bf16.mxu0 0
    %1000 = vmatpush1.bf16.msra.mxu0 %v788
    %1001 = vmatprep.subr.bf16.mxu0 0
    %1002 = vmatpush1.bf16.msra.mxu0 %v789
    %1003 = vmatprep.subr.bf16.mxu0 0
    %1004 = vmatpush1.bf16.msra.mxu0 %v790
    %1005 = vmatprep.subr.bf16.mxu0 0
    %1006 = vmatpush1.bf16.msra.mxu0 %v791
    %1007 = vmatprep.subr.bf16.mxu0 0
    %1008 = vmatpush1.bf16.msra.mxu0 %v792
    %1009 = vmatprep.subr.bf16.mxu0 0
    %1010 = vmatpush1.bf16.msra.mxu0 %v793
    %1011 = vmatprep.subr.bf16.mxu0 0
    %1012 = vmatpush1.bf16.msra.mxu0 %v794
    %1013 = vmatprep.subr.bf16.mxu0 0
    %1014 = vmatpush1.bf16.msra.mxu0 %v795
    %1015 = vmatprep.subr.bf16.mxu0 0
    %1016 = vmatpush1.bf16.msra.mxu0 %v796
    %1017 = vmatprep.mubr.bf16.mxu0 %v156
    %1018 = vmatmul.mubr.bf16.gmra.mrb[0].mxu0 %v155
    %v1019 = vpop.f32.mrb[0].mxu0
    %v1020 = vadd.f32 %v379, %v1019
    %v1021 = vpop.f32.mrb[0].mxu0
    %v1022 = vpop.f32.mrb[0].mxu0
    %v1023 = vpop.f32.mrb[0].mxu0
    %1024 = vdwg.mxu0
    %1025 = vmatprep.subr.bf16.mxu0 0
    %1026 = vmatpush1.bf16.msra.mxu0 %v797
    %1027 = vmatprep.subr.bf16.mxu0 0
    %1028 = vmatpush1.bf16.msra.mxu0 %v798
    %1029 = vmatprep.subr.bf16.mxu0 0
    %1030 = vmatpush1.bf16.msra.mxu0 %v799
    %1031 = vmatprep.subr.bf16.mxu0 0
    %1032 = vmatpush1.bf16.msra.mxu0 %v800
    %1033 = vmatprep.subr.bf16.mxu0 0
    %1034 = vmatpush1.bf16.msra.mxu0 %v801
    %1035 = vmatprep.subr.bf16.mxu0 0
    %1036 = vmatpush1.bf16.msra.mxu0 %v802
    %1037 = vmatprep.subr.bf16.mxu0 0
    %1038 = vmatpush1.bf16.msra.mxu0 %v803
    %1039 = vmatprep.subr.bf16.mxu0 0
    %1040 = vmatpush1.bf16.msra.mxu0 %v804
    %1041 = vmatprep.subr.bf16.mxu0 0
    %1042 = vmatpush1.bf16.msra.mxu0 %v805
    %1043 = vmatprep.subr.bf16.mxu0 0
    %1044 = vmatpush1.bf16.msra.mxu0 %v806
    %1045 = vmatprep.subr.bf16.mxu0 0
    %1046 = vmatpush1.bf16.msra.mxu0 %v807
    %1047 = vmatprep.subr.bf16.mxu0 0
    %1048 = vmatpush1.bf16.msra.mxu0 %v808
    %1049 = vmatprep.subr.bf16.mxu0 0
    %1050 = vmatpush1.bf16.msra.mxu0 %v809
    %1051 = vmatprep.subr.bf16.mxu0 0
    %1052 = vmatpush1.bf16.msra.mxu0 %v810
    %1053 = vmatprep.subr.bf16.mxu0 0
    %1054 = vmatpush1.bf16.msra.mxu0 %v811
    %1055 = vmatprep.subr.bf16.mxu0 0
    %1056 = vmatpush1.bf16.msra.mxu0 %v812
    %1057 = vmatprep.mubr.bf16.mxu0 %v158
    %1058 = vmatmul.mubr.bf16.gmra.mrb[0].mxu0 %v157
    %v1059 = vpop.f32.mrb[0].mxu0
    %v1060 = vadd.f32 %v1020, %v1059
    %v1061 = vpop.f32.mrb[0].mxu0
    %v1062 = vpop.f32.mrb[0].mxu0
    %v1063 = vpop.f32.mrb[0].mxu0
    %1064 = vdwg.mxu0
    %1065 = vmatprep.subr.bf16.mxu0 0
    %1066 = vmatpush1.bf16.msra.mxu0 %v813
    %1067 = vmatprep.subr.bf16.mxu0 0
    %1068 = vmatpush1.bf16.msra.mxu0 %v814
    %1069 = vmatprep.subr.bf16.mxu0 0
    %1070 = vmatpush1.bf16.msra.mxu0 %v815
    %1071 = vmatprep.subr.bf16.mxu0 0
    %1072 = vmatpush1.bf16.msra.mxu0 %v816
    %1073 = vmatprep.subr.bf16.mxu0 0
    %1074 = vmatpush1.bf16.msra.mxu0 %v817
    %1075 = vmatprep.subr.bf16.mxu0 0
    %1076 = vmatpush1.bf16.msra.mxu0 %v818
    %1077 = vmatprep.subr.bf16.mxu0 0
    %1078 = vmatpush1.bf16.msra.mxu0 %v819
    %1079 = vmatprep.subr.bf16.mxu0 0
    %1080 = vmatpush1.bf16.msra.mxu0 %v820
    %1081 = vmatprep.subr.bf16.mxu0 0
    %1082 = vmatpush1.bf16.msra.mxu0 %v821
    %1083 = vmatprep.subr.bf16.mxu0 0
    %1084 = vmatpush1.bf16.msra.mxu0 %v822
    %1085 = vmatprep.subr.bf16.mxu0 0
    %1086 = vmatpush1.bf16.msra.mxu0 %v823
    %1087 = vmatprep.subr.bf16.mxu0 0
    %1088 = vmatpush1.bf16.msra.mxu0 %v824
    %1089 = vmatprep.subr.bf16.mxu0 0
    %1090 = vmatpush1.bf16.msra.mxu0 %v825
    %1091 = vmatprep.subr.bf16.mxu0 0
    %1092 = vmatpush1.bf16.msra.mxu0 %v826
    %1093 = vmatprep.subr.bf16.mxu0 0
    %1094 = vmatpush1.bf16.msra.mxu0 %v827
    %1095 = vmatprep.subr.bf16.mxu0 0
    %1096 = vmatpush1.bf16.msra.mxu0 %v828
    %1097 = vmatprep.mubr.bf16.mxu0 %v160
    %1098 = vmatmul.mubr.bf16.gmra.mrb[0].mxu0 %v159
    %v1099 = vpop.f32.mrb[0].mxu0
    %v1100 = vadd.f32 %v1060, %v1099
    %v1101 = vpop.f32.mrb[0].mxu0
    %v1102 = vpop.f32.mrb[0].mxu0
    %v1103 = vpop.f32.mrb[0].mxu0
    %1104 = vdwg.mxu0
    %1105 = vmatprep.subr.bf16.mxu0 0
    %1106 = vmatpush1.bf16.msra.mxu0 %v829
    %1107 = vmatprep.subr.bf16.mxu0 0
    %1108 = vmatpush1.bf16.msra.mxu0 %v830
    %1109 = vmatprep.subr.bf16.mxu0 0
    %1110 = vmatpush1.bf16.msra.mxu0 %v831
    %1111 = vmatprep.subr.bf16.mxu0 0
    %1112 = vmatpush1.bf16.msra.mxu0 %v832
    %1113 = vmatprep.subr.bf16.mxu0 0
    %1114 = vmatpush1.bf16.msra.mxu0 %v833
    %1115 = vmatprep.subr.bf16.mxu0 0
    %1116 = vmatpush1.bf16.msra.mxu0 %v834
    %1117 = vmatprep.subr.bf16.mxu0 0
    %1118 = vmatpush1.bf16.msra.mxu0 %v835
    %1119 = vmatprep.subr.bf16.mxu0 0
    %1120 = vmatpush1.bf16.msra.mxu0 %v836
    %1121 = vmatprep.subr.bf16.mxu0 0
    %1122 = vmatpush1.bf16.msra.mxu0 %v837
    %1123 = vmatprep.subr.bf16.mxu0 0
    %1124 = vmatpush1.bf16.msra.mxu0 %v838
    %1125 = vmatprep.subr.bf16.mxu0 0
    %1126 = vmatpush1.bf16.msra.mxu0 %v839
    %1127 = vmatprep.subr.bf16.mxu0 0
    %1128 = vmatpush1.bf16.msra.mxu0 %v840
    %1129 = vmatprep.subr.bf16.mxu0 0
    %1130 = vmatpush1.bf16.msra.mxu0 %v841
    %1131 = vmatprep.subr.bf16.mxu0 0
    %1132 = vmatpush1.bf16.msra.mxu0 %v842
    %1133 = vmatprep.subr.bf16.mxu0 0
    %1134 = vmatpush1.bf16.msra.mxu0 %v843
    %1135 = vmatprep.subr.bf16.mxu0 0
    %1136 = vmatpush1.bf16.msra.mxu0 %v844
    %1137 = vmatprep.mubr.bf16.mxu0 %v162
    %1138 = vmatmul.mubr.bf16.gmra.mrb[0].mxu0 %v161
    %v1139 = vpop.f32.mrb[0].mxu0
    %v1140 = vadd.f32 %v1100, %v1139
    %v1141 = vpop.f32.mrb[0].mxu0
    %v1142 = vpop.f32.mrb[0].mxu0
    %v1143 = vpop.f32.mrb[0].mxu0
    %1144 = vdwg.mxu0
    %1145 = vmatprep.subr.bf16.mxu0 0
    %1146 = vmatpush1.bf16.msra.mxu0 %v845
    %1147 = vmatprep.subr.bf16.mxu0 0
    %1148 = vmatpush1.bf16.msra.mxu0 %v846
    %1149 = vmatprep.subr.bf16.mxu0 0
    %1150 = vmatpush1.bf16.msra.mxu0 %v847
    %1151 = vmatprep.subr.bf16.mxu0 0
    %1152 = vmatpush1.bf16.msra.mxu0 %v848
    %1153 = vmatprep.subr.bf16.mxu0 0
    %1154 = vmatpush1.bf16.msra.mxu0 %v849
    %1155 = vmatprep.subr.bf16.mxu0 0
    %1156 = vmatpush1.bf16.msra.mxu0 %v850
    %1157 = vmatprep.subr.bf16.mxu0 0
    %1158 = vmatpush1.bf16.msra.mxu0 %v851
    %1159 = vmatprep.subr.bf16.mxu0 0
    %1160 = vmatpush1.bf16.msra.mxu0 %v852
    %1161 = vmatprep.subr.bf16.mxu0 0
    %1162 = vmatpush1.bf16.msra.mxu0 %v853
    %1163 = vmatprep.subr.bf16.mxu0 0
    %1164 = vmatpush1.bf16.msra.mxu0 %v854
    %1165 = vmatprep.subr.bf16.mxu0 0
    %1166 = vmatpush1.bf16.msra.mxu0 %v855
    %1167 = vmatprep.subr.bf16.mxu0 0
    %1168 = vmatpush1.bf16.msra.mxu0 %v856
    %1169 = vmatprep.subr.bf16.mxu0 0
    %1170 = vmatpush1.bf16.msra.mxu0 %v857
    %1171 = vmatprep.subr.bf16.mxu0 0
    %1172 = vmatpush1.bf16.msra.mxu0 %v858
    %1173 = vmatprep.subr.bf16.mxu0 0
    %1174 = vmatpush1.bf16.msra.mxu0 %v859
    %1175 = vmatprep.subr.bf16.mxu0 0
    %1176 = vmatpush1.bf16.msra.mxu0 %v860
    %1177 = vmatprep.mubr.bf16.mxu0 %v164
    %1178 = vmatmul.mubr.bf16.gmra.mrb[0].mxu0 %v163
    %v1179 = vpop.f32.mrb[0].mxu0
    %v1180 = vadd.f32 %v1140, %v1179
    %v1181 = vpop.f32.mrb[0].mxu0
    %v1182 = vpop.f32.mrb[0].mxu0
    %v1183 = vpop.f32.mrb[0].mxu0
    %1184 = vdwg.mxu0
    %1185 = vmatprep.subr.bf16.mxu0 0
    %1186 = vmatpush1.bf16.msra.mxu0 %v861
    %1187 = vmatprep.subr.bf16.mxu0 0
    %1188 = vmatpush1.bf16.msra.mxu0 %v862
    %1189 = vmatprep.subr.bf16.mxu0 0
    %1190 = vmatpush1.bf16.msra.mxu0 %v863
    %1191 = vmatprep.subr.bf16.mxu0 0
    %1192 = vmatpush1.bf16.msra.mxu0 %v864
    %1193 = vmatprep.subr.bf16.mxu0 0
    %1194 = vmatpush1.bf16.msra.mxu0 %v865
    %1195 = vmatprep.subr.bf16.mxu0 0
    %1196 = vmatpush1.bf16.msra.mxu0 %v866
    %1197 = vmatprep.subr.bf16.mxu0 0
    %1198 = vmatpush1.bf16.msra.mxu0 %v867
    %1199 = vmatprep.subr.bf16.mxu0 0
    %1200 = vmatpush1.bf16.msra.mxu0 %v868
    %1201 = vmatprep.subr.bf16.mxu0 0
    %1202 = vmatpush1.bf16.msra.mxu0 %v869
    %1203 = vmatprep.subr.bf16.mxu0 0
    %1204 = vmatpush1.bf16.msra.mxu0 %v870
    %1205 = vmatprep.subr.bf16.mxu0 0
    %1206 = vmatpush1.bf16.msra.mxu0 %v871
    %1207 = vmatprep.subr.bf16.mxu0 0
    %1208 = vmatpush1.bf16.msra.mxu0 %v872
    %1209 = vmatprep.subr.bf16.mxu0 0
    %1210 = vmatpush1.bf16.msra.mxu0 %v873
    %1211 = vmatprep.subr.bf16.mxu0 0
    %1212 = vmatpush1.bf16.msra.mxu0 %v874
    %1213 = vmatprep.subr.bf16.mxu0 0
    %1214 = vmatpush1.bf16.msra.mxu0 %v875
    %1215 = vmatprep.subr.bf16.mxu0 0
    %1216 = vmatpush1.bf16.msra.mxu0 %v876
    %1217 = vmatprep.mubr.bf16.mxu0 %v166
    %1218 = vmatmul.mubr.bf16.gmra.mrb[0].mxu0 %v165
    %v1219 = vpop.f32.mrb[0].mxu0
    %v1220 = vadd.f32 %v1180, %v1219
    %v1221 = vpop.f32.mrb[0].mxu0
    %v1222 = vpop.f32.mrb[0].mxu0
    %v1223 = vpop.f32.mrb[0].mxu0
    %1224 = vdwg.mxu0
    %1225 = vmatprep.subr.bf16.mxu0 0
    %1226 = vmatpush1.bf16.msra.mxu0 %v877
    %1227 = vmatprep.subr.bf16.mxu0 0
    %1228 = vmatpush1.bf16.msra.mxu0 %v878
    %1229 = vmatprep.subr.bf16.mxu0 0
    %1230 = vmatpush1.bf16.msra.mxu0 %v879
    %1231 = vmatprep.subr.bf16.mxu0 0
    %1232 = vmatpush1.bf16.msra.mxu0 %v880
    %1233 = vmatprep.subr.bf16.mxu0 0
    %1234 = vmatpush1.bf16.msra.mxu0 0
    %1235 = vmatprep.subr.bf16.mxu0 0
    %1236 = vmatpush1.bf16.msra.mxu0 0
    %1237 = vmatprep.subr.bf16.mxu0 0
    %1238 = vmatpush1.bf16.msra.mxu0 0
    %1239 = vmatprep.subr.bf16.mxu0 0
    %1240 = vmatpush1.bf16.msra.mxu0 0
    %1241 = vmatprep.subr.bf16.mxu0 0
    %1242 = vmatpush1.bf16.msra.mxu0 0
    %1243 = vmatprep.subr.bf16.mxu0 0
    %1244 = vmatpush1.bf16.msra.mxu0 0
    %1245 = vmatprep.subr.bf16.mxu0 0
    %1246 = vmatpush1.bf16.msra.mxu0 0
    %1247 = vmatprep.subr.bf16.mxu0 0
    %1248 = vmatpush1.bf16.msra.mxu0 0
    %1249 = vmatprep.subr.bf16.mxu0 0
    %1250 = vmatpush1.bf16.msra.mxu0 0
    %1251 = vmatprep.subr.bf16.mxu0 0
    %1252 = vmatpush1.bf16.msra.mxu0 0
    %1253 = vmatprep.subr.bf16.mxu0 0
    %1254 = vmatpush1.bf16.msra.mxu0 0
    %1255 = vmatprep.subr.bf16.mxu0 0
    %1256 = vmatpush1.bf16.msra.mxu0 0
    %1257 = vmatprep.mubr.bf16.mxu0 0
    %1258 = vmatmul.mubr.bf16.gmra.mrb[0].mxu0 %v983
    %v1259 = vpop.f32.mrb[0].mxu0
    %v1260 = vadd.f32 %v1220, %v1259
    %v1261 = vpop.f32.mrb[0].mxu0
    %v1262 = vpop.f32.mrb[0].mxu0
    %v1263 = vpop.f32.mrb[0].mxu0
    %1264 = vdwg.mxu0
    %v1265 = vmax.f32 %v1260, 0.0
    %v1266 = vpack.c.bf16 %v1265, %v1265
    %v1267 = vld [vmem:[%s3] sm:$0xf]
    %v1268 = vld [vmem:[%s3 + $0x4] sm:$0xf]
    %v1269 = vld [vmem:[%s3 + $0x8] sm:$0xf]
    %v1270 = vld [vmem:[%s3 + $0xc] sm:$0xf]
    %v1271 = vld [vmem:[%s3 + $0x10] sm:$0xf]
    %v1272 = vld [vmem:[%s3 + $0x14] sm:$0xf]
    %v1273 = vld [vmem:[%s3 + $0x18] sm:$0xf]
    %v1274 = vld [vmem:[%s3 + $0x1c] sm:$0xf]
    %1289 = vrot.lane.b32.xlu0 %v156, 56
    %v1290 = vpop.permute.xlu0 %1289
    %1291 = vrot.lane.b32.xlu0 %v157, 56
    %v1292 = vpop.permute.xlu0 %1291
    %1293 = vrot.lane.b32.xlu0 %v158, 56
    %v1294 = vpop.permute.xlu0 %1293
    %1295 = vrot.lane.b32.xlu0 %v159, 56
    %v1296 = vpop.permute.xlu0 %1295
    %1297 = vrot.lane.b32.xlu0 %v160, 56
    %v1298 = vpop.permute.xlu0 %1297
    %1299 = vrot.lane.b32.xlu0 %v161, 56
    %v1300 = vpop.permute.xlu0 %1299
    %1301 = vrot.lane.b32.xlu0 %v162, 56
    %v1302 = vpop.permute.xlu0 %1301
    %1303 = vrot.lane.b32.xlu0 %v163, 56
    %v1304 = vpop.permute.xlu0 %1303
    %1305 = vrot.lane.b32.xlu0 %v164, 56
    %v1306 = vpop.permute.xlu0 %1305
    %1307 = vrot.lane.b32.xlu0 %v165, 56
    %v1308 = vpop.permute.xlu0 %1307
    %1309 = vrot.lane.b32.xlu0 %v166, 56
    %v1310 = vpop.permute.xlu0 %1309
    %1311 = vrot.lane.b32.xlu0 %v167, 56
    %v1312 = vpop.permute.xlu0 %1311
    %1313 = vrot.lane.b32.xlu0 %v168, 56
    %v1314 = vpop.permute.xlu0 %1313
    %1315 = vrot.lane.b32.xlu0 %v169, 56
    %v1316 = vpop.permute.xlu0 %1315
    %vm1317 = vcmask 457728
    %v1318 = vsel %vm1317, %v1290, %v1292
    %v1319 = vsel %vm1317, %v1292, %v1294
    %v1320 = vsel %vm1317, %v1294, %v1296
    %v1321 = vsel %vm1317, %v1296, %v1298
    %v1322 = vsel %vm1317, %v1298, %v1300
    %v1323 = vsel %vm1317, %v1300, %v1302
    %v1324 = vsel %vm1317, %v1302, %v1304
    %v1325 = vsel %vm1317, %v1304, %v1306
    %v1326 = vsel %vm1317, %v1306, %v1308
    %v1327 = vsel %vm1317, %v1308, %v1310
    %v1328 = vsel %vm1317, %v1310, %v1312
    %v1329 = vsel %vm1317, %v1312, %v1314
    %v1330 = vsel %vm1317, %v1314, %v1316
    %v1344 = vsel %vm981, %v1330, 0
    %1346 = vmatprep.subr.bf16.mxu0 0
    %1347 = vmatpush1.bf16.msra.mxu0 %v781
    %1348 = vmatprep.subr.bf16.mxu0 0
    %1349 = vmatpush1.bf16.msra.mxu0 %v782
    %1350 = vmatprep.subr.bf16.mxu0 0
    %1351 = vmatpush1.bf16.msra.mxu0 %v783
    %1352 = vmatprep.subr.bf16.mxu0 0
    %1353 = vmatpush1.bf16.msra.mxu0 %v784
    %1354 = vmatprep.subr.bf16.mxu0 0
    %1355 = vmatpush1.bf16.msra.mxu0 %v785
    %1356 = vmatprep.subr.bf16.mxu0 0
    %1357 = vmatpush1.bf16.msra.mxu0 %v786
    %1358 = vmatprep.subr.bf16.mxu0 0
    %1359 = vmatpush1.bf16.msra.mxu0 %v787
    %1360 = vmatprep.subr.bf16.mxu0 0
    %1361 = vmatpush1.bf16.msra.mxu0 %v788
    %1362 = vmatprep.subr.bf16.mxu0 0
    %1363 = vmatpush1.bf16.msra.mxu0 %v789
    %1364 = vmatprep.subr.bf16.mxu0 0
    %1365 = vmatpush1.bf16.msra.mxu0 %v790
    %1366 = vmatprep.subr.bf16.mxu0 0
    %1367 = vmatpush1.bf16.msra.mxu0 %v791
    %1368 = vmatprep.subr.bf16.mxu0 0
    %1369 = vmatpush1.bf16.msra.mxu0 %v792
    %1370 = vmatprep.subr.bf16.mxu0 0
    %1371 = vmatpush1.bf16.msra.mxu0 %v793
    %1372 = vmatprep.subr.bf16.mxu0 0
    %1373 = vmatpush1.bf16.msra.mxu0 %v794
    %1374 = vmatprep.subr.bf16.mxu0 0
    %1375 = vmatpush1.bf16.msra.mxu0 %v795
    %1376 = vmatprep.subr.bf16.mxu0 0
    %1377 = vmatpush1.bf16.msra.mxu0 %v796
    %1378 = vmatprep.mubr.bf16.mxu0 %v1319
    %1379 = vmatmul.mubr.bf16.gmra.mrb[0].mxu0 %v1318
    %v1380 = vpop.f32.mrb[0].mxu0
    %v1381 = vadd.f32 %v379, %v1380
    %v1382 = vpop.f32.mrb[0].mxu0
    %v1383 = vpop.f32.mrb[0].mxu0
    %v1384 = vpop.f32.mrb[0].mxu0
    %1385 = vdwg.mxu0
    %1386 = vmatprep.subr.bf16.mxu0 0
    %1387 = vmatpush1.bf16.msra.mxu0 %v797
    %1388 = vmatprep.subr.bf16.mxu0 0
    %1389 = vmatpush1.bf16.msra.mxu0 %v798
    %1390 = vmatprep.subr.bf16.mxu0 0
    %1391 = vmatpush1.bf16.msra.mxu0 %v799
    %1392 = vmatprep.subr.bf16.mxu0 0
    %1393 = vmatpush1.bf16.msra.mxu0 %v800
    %1394 = vmatprep.subr.bf16.mxu0 0
    %1395 = vmatpush1.bf16.msra.mxu0 %v801
    %1396 = vmatprep.subr.bf16.mxu0 0
    %1397 = vmatpush1.bf16.msra.mxu0 %v802
    %1398 = vmatprep.subr.bf16.mxu0 0
    %1399 = vmatpush1.bf16.msra.mxu0 %v803
    %1400 = vmatprep.subr.bf16.mxu0 0
    %1401 = vmatpush1.bf16.msra.mxu0 %v804
    %1402 = vmatprep.subr.bf16.mxu0 0
    %1403 = vmatpush1.bf16.msra.mxu0 %v805
    %1404 = vmatprep.subr.bf16.mxu0 0
    %1405 = vmatpush1.bf16.msra.mxu0 %v806
    %1406 = vmatprep.subr.bf16.mxu0 0
    %1407 = vmatpush1.bf16.msra.mxu0 %v807
    %1408 = vmatprep.subr.bf16.mxu0 0
    %1409 = vmatpush1.bf16.msra.mxu0 %v808
    %1410 = vmatprep.subr.bf16.mxu0 0
    %1411 = vmatpush1.bf16.msra.mxu0 %v809
    %1412 = vmatprep.subr.bf16.mxu0 0
    %1413 = vmatpush1.bf16.msra.mxu0 %v810
    %1414 = vmatprep.subr.bf16.mxu0 0
    %1415 = vmatpush1.bf16.msra.mxu0 %v811
    %1416 = vmatprep.subr.bf16.mxu0 0
    %1417 = vmatpush1.bf16.msra.mxu0 %v812
    %1418 = vmatprep.mubr.bf16.mxu0 %v1321
    %1419 = vmatmul.mubr.bf16.gmra.mrb[0].mxu0 %v1320
    %v1420 = vpop.f32.mrb[0].mxu0
    %v1421 = vadd.f32 %v1381, %v1420
    %v1422 = vpop.f32.mrb[0].mxu0
    %v1423 = vpop.f32.mrb[0].mxu0
    %v1424 = vpop.f32.mrb[0].mxu0
    %1425 = vdwg.mxu0
    %1426 = vmatprep.subr.bf16.mxu0 0
    %1427 = vmatpush1.bf16.msra.mxu0 %v813
    %1428 = vmatprep.subr.bf16.mxu0 0
    %1429 = vmatpush1.bf16.msra.mxu0 %v814
    %1430 = vmatprep.subr.bf16.mxu0 0
    %1431 = vmatpush1.bf16.msra.mxu0 %v815
    %1432 = vmatprep.subr.bf16.mxu0 0
    %1433 = vmatpush1.bf16.msra.mxu0 %v816
    %1434 = vmatprep.subr.bf16.mxu0 0
    %1435 = vmatpush1.bf16.msra.mxu0 %v817
    %1436 = vmatprep.subr.bf16.mxu0 0
    %1437 = vmatpush1.bf16.msra.mxu0 %v818
    %1438 = vmatprep.subr.bf16.mxu0 0
    %1439 = vmatpush1.bf16.msra.mxu0 %v819
    %1440 = vmatprep.subr.bf16.mxu0 0
    %1441 = vmatpush1.bf16.msra.mxu0 %v820
    %1442 = vmatprep.subr.bf16.mxu0 0
    %1443 = vmatpush1.bf16.msra.mxu0 %v821
    %1444 = vmatprep.subr.bf16.mxu0 0
    %1445 = vmatpush1.bf16.msra.mxu0 %v822
    %1446 = vmatprep.subr.bf16.mxu0 0
    %1447 = vmatpush1.bf16.msra.mxu0 %v823
    %1448 = vmatprep.subr.bf16.mxu0 0
    %1449 = vmatpush1.bf16.msra.mxu0 %v824
    %1450 = vmatprep.subr.bf16.mxu0 0
    %1451 = vmatpush1.bf16.msra.mxu0 %v825
    %1452 = vmatprep.subr.bf16.mxu0 0
    %1453 = vmatpush1.bf16.msra.mxu0 %v826
    %1454 = vmatprep.subr.bf16.mxu0 0
    %1455 = vmatpush1.bf16.msra.mxu0 %v827
    %1456 = vmatprep.subr.bf16.mxu0 0
    %1457 = vmatpush1.bf16.msra.mxu0 %v828
    %1458 = vmatprep.mubr.bf16.mxu0 %v1323
    %1459 = vmatmul.mubr.bf16.gmra.mrb[0].mxu0 %v1322
    %v1460 = vpop.f32.mrb[0].mxu0
    %v1461 = vadd.f32 %v1421, %v1460
    %v1462 = vpop.f32.mrb[0].mxu0
    %v1463 = vpop.f32.mrb[0].mxu0
    %v1464 = vpop.f32.mrb[0].mxu0
    %1465 = vdwg.mxu0
    %1466 = vmatprep.subr.bf16.mxu0 0
    %1467 = vmatpush1.bf16.msra.mxu0 %v829
    %1468 = vmatprep.subr.bf16.mxu0 0
    %1469 = vmatpush1.bf16.msra.mxu0 %v830
    %1470 = vmatprep.subr.bf16.mxu0 0
    %1471 = vmatpush1.bf16.msra.mxu0 %v831
    %1472 = vmatprep.subr.bf16.mxu0 0
    %1473 = vmatpush1.bf16.msra.mxu0 %v832
    %1474 = vmatprep.subr.bf16.mxu0 0
    %1475 = vmatpush1.bf16.msra.mxu0 %v833
    %1476 = vmatprep.subr.bf16.mxu0 0
    %1477 = vmatpush1.bf16.msra.mxu0 %v834
    %1478 = vmatprep.subr.bf16.mxu0 0
    %1479 = vmatpush1.bf16.msra.mxu0 %v835
    %1480 = vmatprep.subr.bf16.mxu0 0
    %1481 = vmatpush1.bf16.msra.mxu0 %v836
    %1482 = vmatprep.subr.bf16.mxu0 0
    %1483 = vmatpush1.bf16.msra.mxu0 %v837
    %1484 = vmatprep.subr.bf16.mxu0 0
    %1485 = vmatpush1.bf16.msra.mxu0 %v838
    %1486 = vmatprep.subr.bf16.mxu0 0
    %1487 = vmatpush1.bf16.msra.mxu0 %v839
    %1488 = vmatprep.subr.bf16.mxu0 0
    %1489 = vmatpush1.bf16.msra.mxu0 %v840
    %1490 = vmatprep.subr.bf16.mxu0 0
    %1491 = vmatpush1.bf16.msra.mxu0 %v841
    %1492 = vmatprep.subr.bf16.mxu0 0
    %1493 = vmatpush1.bf16.msra.mxu0 %v842
    %1494 = vmatprep.subr.bf16.mxu0 0
    %1495 = vmatpush1.bf16.msra.mxu0 %v843
    %1496 = vmatprep.subr.bf16.mxu0 0
    %1497 = vmatpush1.bf16.msra.mxu0 %v844
    %1498 = vmatprep.mubr.bf16.mxu0 %v1325
    %1499 = vmatmul.mubr.bf16.gmra.mrb[0].mxu0 %v1324
    %v1500 = vpop.f32.mrb[0].mxu0
    %v1501 = vadd.f32 %v1461, %v1500
    %v1502 = vpop.f32.mrb[0].mxu0
    %v1503 = vpop.f32.mrb[0].mxu0
    %v1504 = vpop.f32.mrb[0].mxu0
    %1505 = vdwg.mxu0
    %1506 = vmatprep.subr.bf16.mxu0 0
    %1507 = vmatpush1.bf16.msra.mxu0 %v845
    %1508 = vmatprep.subr.bf16.mxu0 0
    %1509 = vmatpush1.bf16.msra.mxu0 %v846
    %1510 = vmatprep.subr.bf16.mxu0 0
    %1511 = vmatpush1.bf16.msra.mxu0 %v847
    %1512 = vmatprep.subr.bf16.mxu0 0
    %1513 = vmatpush1.bf16.msra.mxu0 %v848
    %1514 = vmatprep.subr.bf16.mxu0 0
    %1515 = vmatpush1.bf16.msra.mxu0 %v849
    %1516 = vmatprep.subr.bf16.mxu0 0
    %1517 = vmatpush1.bf16.msra.mxu0 %v850
    %1518 = vmatprep.subr.bf16.mxu0 0
    %1519 = vmatpush1.bf16.msra.mxu0 %v851
    %1520 = vmatprep.subr.bf16.mxu0 0
    %1521 = vmatpush1.bf16.msra.mxu0 %v852
    %1522 = vmatprep.subr.bf16.mxu0 0
    %1523 = vmatpush1.bf16.msra.mxu0 %v853
    %1524 = vmatprep.subr.bf16.mxu0 0
    %1525 = vmatpush1.bf16.msra.mxu0 %v854
    %1526 = vmatprep.subr.bf16.mxu0 0
    %1527 = vmatpush1.bf16.msra.mxu0 %v855
    %1528 = vmatprep.subr.bf16.mxu0 0
    %1529 = vmatpush1.bf16.msra.mxu0 %v856
    %1530 = vmatprep.subr.bf16.mxu0 0
    %1531 = vmatpush1.bf16.msra.mxu0 %v857
    %1532 = vmatprep.subr.bf16.mxu0 0
    %1533 = vmatpush1.bf16.msra.mxu0 %v858
    %1534 = vmatprep.subr.bf16.mxu0 0
    %1535 = vmatpush1.bf16.msra.mxu0 %v859
    %1536 = vmatprep.subr.bf16.mxu0 0
    %1537 = vmatpush1.bf16.msra.mxu0 %v860
    %1538 = vmatprep.mubr.bf16.mxu0 %v1327
    %1539 = vmatmul.mubr.bf16.gmra.mrb[0].mxu0 %v1326
    %v1540 = vpop.f32.mrb[0].mxu0
    %v1541 = vadd.f32 %v1501, %v1540
    %v1542 = vpop.f32.mrb[0].mxu0
    %v1543 = vpop.f32.mrb[0].mxu0
    %v1544 = vpop.f32.mrb[0].mxu0
    %1545 = vdwg.mxu0
    %1546 = vmatprep.subr.bf16.mxu0 0
    %1547 = vmatpush1.bf16.msra.mxu0 %v861
    %1548 = vmatprep.subr.bf16.mxu0 0
    %1549 = vmatpush1.bf16.msra.mxu0 %v862
    %1550 = vmatprep.subr.bf16.mxu0 0
    %1551 = vmatpush1.bf16.msra.mxu0 %v863
    %1552 = vmatprep.subr.bf16.mxu0 0
    %1553 = vmatpush1.bf16.msra.mxu0 %v864
    %1554 = vmatprep.subr.bf16.mxu0 0
    %1555 = vmatpush1.bf16.msra.mxu0 %v865
    %1556 = vmatprep.subr.bf16.mxu0 0
    %1557 = vmatpush1.bf16.msra.mxu0 %v866
    %1558 = vmatprep.subr.bf16.mxu0 0
    %1559 = vmatpush1.bf16.msra.mxu0 %v867
    %1560 = vmatprep.subr.bf16.mxu0 0
    %1561 = vmatpush1.bf16.msra.mxu0 %v868
    %1562 = vmatprep.subr.bf16.mxu0 0
    %1563 = vmatpush1.bf16.msra.mxu0 %v869
    %1564 = vmatprep.subr.bf16.mxu0 0
    %1565 = vmatpush1.bf16.msra.mxu0 %v870
    %1566 = vmatprep.subr.bf16.mxu0 0
    %1567 = vmatpush1.bf16.msra.mxu0 %v871
    %1568 = vmatprep.subr.bf16.mxu0 0
    %1569 = vmatpush1.bf16.msra.mxu0 %v872
    %1570 = vmatprep.subr.bf16.mxu0 0
    %1571 = vmatpush1.bf16.msra.mxu0 %v873
    %1572 = vmatprep.subr.bf16.mxu0 0
    %1573 = vmatpush1.bf16.msra.mxu0 %v874
    %1574 = vmatprep.subr.bf16.mxu0 0
    %1575 = vmatpush1.bf16.msra.mxu0 %v875
    %1576 = vmatprep.subr.bf16.mxu0 0
    %1577 = vmatpush1.bf16.msra.mxu0 %v876
    %1578 = vmatprep.mubr.bf16.mxu0 %v1329
    %1579 = vmatmul.mubr.bf16.gmra.mrb[0].mxu0 %v1328
    %v1580 = vpop.f32.mrb[0].mxu0
    %v1581 = vadd.f32 %v1541, %v1580
    %v1582 = vpop.f32.mrb[0].mxu0
    %v1583 = vpop.f32.mrb[0].mxu0
    %v1584 = vpop.f32.mrb[0].mxu0
    %1585 = vdwg.mxu0
    %1586 = vmatprep.subr.bf16.mxu0 0
    %1587 = vmatpush1.bf16.msra.mxu0 %v877
    %1588 = vmatprep.subr.bf16.mxu0 0
    %1589 = vmatpush1.bf16.msra.mxu0 %v878
    %1590 = vmatprep.subr.bf16.mxu0 0
    %1591 = vmatpush1.bf16.msra.mxu0 %v879
    %1592 = vmatprep.subr.bf16.mxu0 0
    %1593 = vmatpush1.bf16.msra.mxu0 %v880
    %1594 = vmatprep.subr.bf16.mxu0 0
    %1595 = vmatpush1.bf16.msra.mxu0 0
    %1596 = vmatprep.subr.bf16.mxu0 0
    %1597 = vmatpush1.bf16.msra.mxu0 0
    %1598 = vmatprep.subr.bf16.mxu0 0
    %1599 = vmatpush1.bf16.msra.mxu0 0
    %1600 = vmatprep.subr.bf16.mxu0 0
    %1601 = vmatpush1.bf16.msra.mxu0 0
    %1602 = vmatprep.subr.bf16.mxu0 0
    %1603 = vmatpush1.bf16.msra.mxu0 0
    %1604 = vmatprep.subr.bf16.mxu0 0
    %1605 = vmatpush1.bf16.msra.mxu0 0
    %1606 = vmatprep.subr.bf16.mxu0 0
    %1607 = vmatpush1.bf16.msra.mxu0 0
    %1608 = vmatprep.subr.bf16.mxu0 0
    %1609 = vmatpush1.bf16.msra.mxu0 0
    %1610 = vmatprep.subr.bf16.mxu0 0
    %1611 = vmatpush1.bf16.msra.mxu0 0
    %1612 = vmatprep.subr.bf16.mxu0 0
    %1613 = vmatpush1.bf16.msra.mxu0 0
    %1614 = vmatprep.subr.bf16.mxu0 0
    %1615 = vmatpush1.bf16.msra.mxu0 0
    %1616 = vmatprep.subr.bf16.mxu0 0
    %1617 = vmatpush1.bf16.msra.mxu0 0
    %1618 = vmatprep.mubr.bf16.mxu0 0
    %1619 = vmatmul.mubr.bf16.gmra.mrb[0].mxu0 %v1344
    %v1620 = vpop.f32.mrb[0].mxu0
    %v1621 = vadd.f32 %v1581, %v1620
    %v1622 = vpop.f32.mrb[0].mxu0
    %v1623 = vpop.f32.mrb[0].mxu0
    %v1624 = vpop.f32.mrb[0].mxu0
    %1625 = vdwg.mxu0
    %v1626 = vmax.f32 %v1621, 0.0
    %v1627 = vpack.c.bf16 %v1626, %v1626
    %v1628 = vld [vmem:[%s3 + $0x20] sm:$0xf]
    %v1629 = vld [vmem:[%s3 + $0x24] sm:$0xf]
    %v1630 = vld [vmem:[%s3 + $0x28] sm:$0xf]
    %v1631 = vld [vmem:[%s3 + $0x2c] sm:$0xf]
    %v1632 = vld [vmem:[%s3 + $0x30] sm:$0xf]
    %v1633 = vld [vmem:[%s3 + $0x34] sm:$0xf]
    %v1634 = vld [vmem:[%s3 + $0x38] sm:$0xf]
    %v1635 = vld [vmem:[%s3 + $0x3c] sm:$0xf]
    %v1644 = vunpack.c.l.b16 %v1628
    %v1645 = vunpack.c.l.b16 %v1629
    %v1646 = vunpack.c.l.b16 %v1630
    %v1647 = vunpack.c.l.b16 %v1631
    %v1648 = vunpack.c.l.b16 %v1632
    %v1649 = vunpack.c.l.b16 %v1633
    %v1650 = vunpack.c.l.b16 %v1634
    %v1651 = vunpack.c.l.b16 %v1635
    %v1652 = vpack.c.b16 %v1645, %v1644
    %v1653 = vpack.c.b16 %v1647, %v1646
    %v1654 = vpack.c.b16 %v1649, %v1648
    %v1655 = vpack.c.b16 %v1651, %v1650
    %v1661 = vsel %vm981, %v1627, 0
    %1663 = vmatprep.subr.bf16.mxu0 0
    %1664 = vmatpush1.bf16.msra.mxu0 %v1652
    %1665 = vmatprep.subr.bf16.mxu0 0
    %1666 = vmatpush1.bf16.msra.mxu0 %v1653
    %1667 = vmatprep.subr.bf16.mxu0 0
    %1668 = vmatpush1.bf16.msra.mxu0 %v1654
    %1669 = vmatprep.subr.bf16.mxu0 0
    %1670 = vmatpush1.bf16.msra.mxu0 %v1655
    %1671 = vmatprep.subr.bf16.mxu0 0
    %1672 = vmatpush1.bf16.msra.mxu0 0
    %1673 = vmatprep.subr.bf16.mxu0 0
    %1674 = vmatpush1.bf16.msra.mxu0 0
    %1675 = vmatprep.subr.bf16.mxu0 0
    %1676 = vmatpush1.bf16.msra.mxu0 0
    %1677 = vmatprep.subr.bf16.mxu0 0
    %1678 = vmatpush1.bf16.msra.mxu0 0
    %1679 = vmatprep.subr.bf16.mxu0 0
    %1680 = vmatpush1.bf16.msra.mxu0 0
    %1681 = vmatprep.subr.bf16.mxu0 0
    %1682 = vmatpush1.bf16.msra.mxu0 0
    %1683 = vmatprep.subr.bf16.mxu0 0
    %1684 = vmatpush1.bf16.msra.mxu0 0
    %1685 = vmatprep.subr.bf16.mxu0 0
    %1686 = vmatpush1.bf16.msra.mxu0 0
    %1687 = vmatprep.subr.bf16.mxu0 0
    %1688 = vmatpush1.bf16.msra.mxu0 0
    %1689 = vmatprep.subr.bf16.mxu0 0
    %1690 = vmatpush1.bf16.msra.mxu0 0
    %1691 = vmatprep.subr.bf16.mxu0 0
    %1692 = vmatpush1.bf16.msra.mxu0 0
    %1693 = vmatprep.subr.bf16.mxu0 0
    %1694 = vmatpush1.bf16.msra.mxu0 0
    %1695 = vmatprep.mubr.bf16.mxu0 0
    %1696 = vmatmul.mubr.bf16.gmra.mrb[0].mxu0 %v1661
    %v1697 = vpop.f32.mrb[0].mxu0
    %v1698 = vadd.f32 0.0, %v1697
    %v1699 = vpop.f32.mrb[0].mxu0
    %v1700 = vpop.f32.mrb[0].mxu0
    %v1701 = vpop.f32.mrb[0].mxu0
    %1702 = vdwg.mxu0
    %v1711 = vunpack.c.l.b16 %v1267
    %v1712 = vunpack.c.l.b16 %v1268
    %v1713 = vunpack.c.l.b16 %v1269
    %v1714 = vunpack.c.l.b16 %v1270
    %v1715 = vunpack.c.l.b16 %v1271
    %v1716 = vunpack.c.l.b16 %v1272
    %v1717 = vunpack.c.l.b16 %v1273
    %v1718 = vunpack.c.l.b16 %v1274
    %v1719 = vpack.c.b16 %v1712, %v1711
    %v1720 = vpack.c.b16 %v1714, %v1713
    %v1721 = vpack.c.b16 %v1716, %v1715
    %v1722 = vpack.c.b16 %v1718, %v1717
    %v1728 = vsel %vm981, %v1266, 0
    %1730 = vmatprep.subr.bf16.mxu0 0
    %1731 = vmatpush1.bf16.msra.mxu0 %v1719
    %1732 = vmatprep.subr.bf16.mxu0 0
    %1733 = vmatpush1.bf16.msra.mxu0 %v1720
    %1734 = vmatprep.subr.bf16.mxu0 0
    %1735 = vmatpush1.bf16.msra.mxu0 %v1721
    %1736 = vmatprep.subr.bf16.mxu0 0
    %1737 = vmatpush1.bf16.msra.mxu0 %v1722
    %1738 = vmatprep.subr.bf16.mxu0 0
    %1739 = vmatpush1.bf16.msra.mxu0 0
    %1740 = vmatprep.subr.bf16.mxu0 0
    %1741 = vmatpush1.bf16.msra.mxu0 0
    %1742 = vmatprep.subr.bf16.mxu0 0
    %1743 = vmatpush1.bf16.msra.mxu0 0
    %1744 = vmatprep.subr.bf16.mxu0 0
    %1745 = vmatpush1.bf16.msra.mxu0 0
    %1746 = vmatprep.subr.bf16.mxu0 0
    %1747 = vmatpush1.bf16.msra.mxu0 0
    %1748 = vmatprep.subr.bf16.mxu0 0
    %1749 = vmatpush1.bf16.msra.mxu0 0
    %1750 = vmatprep.subr.bf16.mxu0 0
    %1751 = vmatpush1.bf16.msra.mxu0 0
    %1752 = vmatprep.subr.bf16.mxu0 0
    %1753 = vmatpush1.bf16.msra.mxu0 0
    %1754 = vmatprep.subr.bf16.mxu0 0
    %1755 = vmatpush1.bf16.msra.mxu0 0
    %1756 = vmatprep.subr.bf16.mxu0 0
    %1757 = vmatpush1.bf16.msra.mxu0 0
    %1758 = vmatprep.subr.bf16.mxu0 0
    %1759 = vmatpush1.bf16.msra.mxu0 0
    %1760 = vmatprep.subr.bf16.mxu0 0
    %1761 = vmatpush1.bf16.msra.mxu0 0
    %1762 = vmatprep.mubr.bf16.mxu0 0
    %1763 = vmatmul.mubr.bf16.gmra.mrb[0].mxu0 %v1728
    %v1764 = vpop.f32.mrb[0].mxu0
    %v1765 = vadd.f32 %v1698, %v1764
    %v1766 = vpop.f32.mrb[0].mxu0
    %v1767 = vpop.f32.mrb[0].mxu0
    %v1768 = vpop.f32.mrb[0].mxu0
    %1769 = vdwg.mxu0
    %1771 = vrot.lane.b32.xlu0 %v158, 112
    %v1772 = vpop.permute.xlu0 %1771
    %1773 = vrot.lane.b32.xlu0 %v159, 112
    %v1774 = vpop.permute.xlu0 %1773
    %1775 = vrot.lane.b32.xlu0 %v160, 112
    %v1776 = vpop.permute.xlu0 %1775
    %1777 = vrot.lane.b32.xlu0 %v161, 112
    %v1778 = vpop.permute.xlu0 %1777
    %1779 = vrot.lane.b32.xlu0 %v162, 112
    %v1780 = vpop.permute.xlu0 %1779
    %1781 = vrot.lane.b32.xlu0 %v163, 112
    %v1782 = vpop.permute.xlu0 %1781
    %1783 = vrot.lane.b32.xlu0 %v164, 112
    %v1784 = vpop.permute.xlu0 %1783
    %1785 = vrot.lane.b32.xlu0 %v165, 112
    %v1786 = vpop.permute.xlu0 %1785
    %1787 = vrot.lane.b32.xlu0 %v166, 112
    %v1788 = vpop.permute.xlu0 %1787
    %1789 = vrot.lane.b32.xlu0 %v167, 112
    %v1790 = vpop.permute.xlu0 %1789
    %1791 = vrot.lane.b32.xlu0 %v168, 112
    %v1792 = vpop.permute.xlu0 %1791
    %1793 = vrot.lane.b32.xlu0 %v169, 112
    %v1794 = vpop.permute.xlu0 %1793
    %1795 = vrot.lane.b32.xlu0 %v170, 112
    %v1796 = vpop.permute.xlu0 %1795
    %vm1797 = vcmask 916480
    %v1798 = vsel %vm1797, %v1772, %v1774
    %v1799 = vsel %vm1797, %v1774, %v1776
    %v1800 = vsel %vm1797, %v1776, %v1778
    %v1801 = vsel %vm1797, %v1778, %v1780
    %v1802 = vsel %vm1797, %v1780, %v1782
    %v1803 = vsel %vm1797, %v1782, %v1784
    %v1804 = vsel %vm1797, %v1784, %v1786
    %v1805 = vsel %vm1797, %v1786, %v1788
    %v1806 = vsel %vm1797, %v1788, %v1790
    %v1807 = vsel %vm1797, %v1790, %v1792
    %v1808 = vsel %vm1797, %v1792, %v1794
    %v1809 = vsel %vm1797, %v1794, %v1796
    %v1823 = vsel %vm981, %v1796, 0
    %1825 = vmatprep.subr.bf16.mxu0 0
    %1826 = vmatpush1.bf16.msra.mxu0 %v781
    %1827 = vmatprep.subr.bf16.mxu0 0
    %1828 = vmatpush1.bf16.msra.mxu0 %v782
    %1829 = vmatprep.subr.bf16.mxu0 0
    %1830 = vmatpush1.bf16.msra.mxu0 %v783
    %1831 = vmatprep.subr.bf16.mxu0 0
    %1832 = vmatpush1.bf16.msra.mxu0 %v784
    %1833 = vmatprep.subr.bf16.mxu0 0
    %1834 = vmatpush1.bf16.msra.mxu0 %v785
    %1835 = vmatprep.subr.bf16.mxu0 0
    %1836 = vmatpush1.bf16.msra.mxu0 %v786
    %1837 = vmatprep.subr.bf16.mxu0 0
    %1838 = vmatpush1.bf16.msra.mxu0 %v787
    %1839 = vmatprep.subr.bf16.mxu0 0
    %1840 = vmatpush1.bf16.msra.mxu0 %v788
    %1841 = vmatprep.subr.bf16.mxu0 0
    %1842 = vmatpush1.bf16.msra.mxu0 %v789
    %1843 = vmatprep.subr.bf16.mxu0 0
    %1844 = vmatpush1.bf16.msra.mxu0 %v790
    %1845 = vmatprep.subr.bf16.mxu0 0
    %1846 = vmatpush1.bf16.msra.mxu0 %v791
    %1847 = vmatprep.subr.bf16.mxu0 0
    %1848 = vmatpush1.bf16.msra.mxu0 %v792
    %1849 = vmatprep.subr.bf16.mxu0 0
    %1850 = vmatpush1.bf16.msra.mxu0 %v793
    %1851 = vmatprep.subr.bf16.mxu0 0
    %1852 = vmatpush1.bf16.msra.mxu0 %v794
    %1853 = vmatprep.subr.bf16.mxu0 0
    %1854 = vmatpush1.bf16.msra.mxu0 %v795
    %1855 = vmatprep.subr.bf16.mxu0 0
    %1856 = vmatpush1.bf16.msra.mxu0 %v796
    %1857 = vmatprep.mubr.bf16.mxu0 %v1799
    %1858 = vmatmul.mubr.bf16.gmra.mrb[0].mxu0 %v1798
    %v1859 = vpop.f32.mrb[0].mxu0
    %v1860 = vadd.f32 %v379, %v1859
    %v1861 = vpop.f32.mrb[0].mxu0
    %v1862 = vpop.f32.mrb[0].mxu0
    %v1863 = vpop.f32.mrb[0].mxu0
    %1864 = vdwg.mxu0
    %1865 = vmatprep.subr.bf16.mxu0 0
    %1866 = vmatpush1.bf16.msra.mxu0 %v797
    %1867 = vmatprep.subr.bf16.mxu0 0
    %1868 = vmatpush1.bf16.msra.mxu0 %v798
    %1869 = vmatprep.subr.bf16.mxu0 0
    %1870 = vmatpush1.bf16.msra.mxu0 %v799
    %1871 = vmatprep.subr.bf16.mxu0 0
    %1872 = vmatpush1.bf16.msra.mxu0 %v800
    %1873 = vmatprep.subr.bf16.mxu0 0
    %1874 = vmatpush1.bf16.msra.mxu0 %v801
    %1875 = vmatprep.subr.bf16.mxu0 0
    %1876 = vmatpush1.bf16.msra.mxu0 %v802
    %1877 = vmatprep.subr.bf16.mxu0 0
    %1878 = vmatpush1.bf16.msra.mxu0 %v803
    %1879 = vmatprep.subr.bf16.mxu0 0
    %1880 = vmatpush1.bf16.msra.mxu0 %v804
    %1881 = vmatprep.subr.bf16.mxu0 0
    %1882 = vmatpush1.bf16.msra.mxu0 %v805
    %1883 = vmatprep.subr.bf16.mxu0 0
    %1884 = vmatpush1.bf16.msra.mxu0 %v806
    %1885 = vmatprep.subr.bf16.mxu0 0
    %1886 = vmatpush1.bf16.msra.mxu0 %v807
    %1887 = vmatprep.subr.bf16.mxu0 0
    %1888 = vmatpush1.bf16.msra.mxu0 %v808
    %1889 = vmatprep.subr.bf16.mxu0 0
    %1890 = vmatpush1.bf16.msra.mxu0 %v809
    %1891 = vmatprep.subr.bf16.mxu0 0
    %1892 = vmatpush1.bf16.msra.mxu0 %v810
    %1893 = vmatprep.subr.bf16.mxu0 0
    %1894 = vmatpush1.bf16.msra.mxu0 %v811
    %1895 = vmatprep.subr.bf16.mxu0 0
    %1896 = vmatpush1.bf16.msra.mxu0 %v812
    %1897 = vmatprep.mubr.bf16.mxu0 %v1801
    %1898 = vmatmul.mubr.bf16.gmra.mrb[0].mxu0 %v1800
    %v1899 = vpop.f32.mrb[0].mxu0
    %v1900 = vadd.f32 %v1860, %v1899
    %v1901 = vpop.f32.mrb[0].mxu0
    %v1902 = vpop.f32.mrb[0].mxu0
    %v1903 = vpop.f32.mrb[0].mxu0
    %1904 = vdwg.mxu0
    %1905 = vmatprep.subr.bf16.mxu0 0
    %1906 = vmatpush1.bf16.msra.mxu0 %v813
    %1907 = vmatprep.subr.bf16.mxu0 0
    %1908 = vmatpush1.bf16.msra.mxu0 %v814
    %1909 = vmatprep.subr.bf16.mxu0 0
    %1910 = vmatpush1.bf16.msra.mxu0 %v815
    %1911 = vmatprep.subr.bf16.mxu0 0
    %1912 = vmatpush1.bf16.msra.mxu0 %v816
    %1913 = vmatprep.subr.bf16.mxu0 0
    %1914 = vmatpush1.bf16.msra.mxu0 %v817
    %1915 = vmatprep.subr.bf16.mxu0 0
    %1916 = vmatpush1.bf16.msra.mxu0 %v818
    %1917 = vmatprep.subr.bf16.mxu0 0
    %1918 = vmatpush1.bf16.msra.mxu0 %v819
    %1919 = vmatprep.subr.bf16.mxu0 0
    %1920 = vmatpush1.bf16.msra.mxu0 %v820
    %1921 = vmatprep.subr.bf16.mxu0 0
    %1922 = vmatpush1.bf16.msra.mxu0 %v821
    %1923 = vmatprep.subr.bf16.mxu0 0
    %1924 = vmatpush1.bf16.msra.mxu0 %v822
    %1925 = vmatprep.subr.bf16.mxu0 0
    %1926 = vmatpush1.bf16.msra.mxu0 %v823
    %1927 = vmatprep.subr.bf16.mxu0 0
    %1928 = vmatpush1.bf16.msra.mxu0 %v824
    %1929 = vmatprep.subr.bf16.mxu0 0
    %1930 = vmatpush1.bf16.msra.mxu0 %v825
    %1931 = vmatprep.subr.bf16.mxu0 0
    %1932 = vmatpush1.bf16.msra.mxu0 %v826
    %1933 = vmatprep.subr.bf16.mxu0 0
    %1934 = vmatpush1.bf16.msra.mxu0 %v827
    %1935 = vmatprep.subr.bf16.mxu0 0
    %1936 = vmatpush1.bf16.msra.mxu0 %v828
    %1937 = vmatprep.mubr.bf16.mxu0 %v1803
    %1938 = vmatmul.mubr.bf16.gmra.mrb[0].mxu0 %v1802
    %v1939 = vpop.f32.mrb[0].mxu0
    %v1940 = vadd.f32 %v1900, %v1939
    %v1941 = vpop.f32.mrb[0].mxu0
    %v1942 = vpop.f32.mrb[0].mxu0
    %v1943 = vpop.f32.mrb[0].mxu0
    %1944 = vdwg.mxu0
    %1945 = vmatprep.subr.bf16.mxu0 0
    %1946 = vmatpush1.bf16.msra.mxu0 %v829
    %1947 = vmatprep.subr.bf16.mxu0 0
    %1948 = vmatpush1.bf16.msra.mxu0 %v830
    %1949 = vmatprep.subr.bf16.mxu0 0
    %1950 = vmatpush1.bf16.msra.mxu0 %v831
    %1951 = vmatprep.subr.bf16.mxu0 0
    %1952 = vmatpush1.bf16.msra.mxu0 %v832
    %1953 = vmatprep.subr.bf16.mxu0 0
    %1954 = vmatpush1.bf16.msra.mxu0 %v833
    %1955 = vmatprep.subr.bf16.mxu0 0
    %1956 = vmatpush1.bf16.msra.mxu0 %v834
    %1957 = vmatprep.subr.bf16.mxu0 0
    %1958 = vmatpush1.bf16.msra.mxu0 %v835
    %1959 = vmatprep.subr.bf16.mxu0 0
    %1960 = vmatpush1.bf16.msra.mxu0 %v836
    %1961 = vmatprep.subr.bf16.mxu0 0
    %1962 = vmatpush1.bf16.msra.mxu0 %v837
    %1963 = vmatprep.subr.bf16.mxu0 0
    %1964 = vmatpush1.bf16.msra.mxu0 %v838
    %1965 = vmatprep.subr.bf16.mxu0 0
    %1966 = vmatpush1.bf16.msra.mxu0 %v839
    %1967 = vmatprep.subr.bf16.mxu0 0
    %1968 = vmatpush1.bf16.msra.mxu0 %v840
    %1969 = vmatprep.subr.bf16.mxu0 0
    %1970 = vmatpush1.bf16.msra.mxu0 %v841
    %1971 = vmatprep.subr.bf16.mxu0 0
    %1972 = vmatpush1.bf16.msra.mxu0 %v842
    %1973 = vmatprep.subr.bf16.mxu0 0
    %1974 = vmatpush1.bf16.msra.mxu0 %v843
    %1975 = vmatprep.subr.bf16.mxu0 0
    %1976 = vmatpush1.bf16.msra.mxu0 %v844
    %1977 = vmatprep.mubr.bf16.mxu0 %v1805
    %1978 = vmatmul.mubr.bf16.gmra.mrb[0].mxu0 %v1804
    %v1979 = vpop.f32.mrb[0].mxu0
    %v1980 = vadd.f32 %v1940, %v1979
    %v1981 = vpop.f32.mrb[0].mxu0
    %v1982 = vpop.f32.mrb[0].mxu0
    %v1983 = vpop.f32.mrb[0].mxu0
    %1984 = vdwg.mxu0
    %1985 = vmatprep.subr.bf16.mxu0 0
    %1986 = vmatpush1.bf16.msra.mxu0 %v845
    %1987 = vmatprep.subr.bf16.mxu0 0
    %1988 = vmatpush1.bf16.msra.mxu0 %v846
    %1989 = vmatprep.subr.bf16.mxu0 0
    %1990 = vmatpush1.bf16.msra.mxu0 %v847
    %1991 = vmatprep.subr.bf16.mxu0 0
    %1992 = vmatpush1.bf16.msra.mxu0 %v848
    %1993 = vmatprep.subr.bf16.mxu0 0
    %1994 = vmatpush1.bf16.msra.mxu0 %v849
    %1995 = vmatprep.subr.bf16.mxu0 0
    %1996 = vmatpush1.bf16.msra.mxu0 %v850
    %1997 = vmatprep.subr.bf16.mxu0 0
    %1998 = vmatpush1.bf16.msra.mxu0 %v851
    %1999 = vmatprep.subr.bf16.mxu0 0
    %2000 = vmatpush1.bf16.msra.mxu0 %v852
    %2001 = vmatprep.subr.bf16.mxu0 0
    %2002 = vmatpush1.bf16.msra.mxu0 %v853
    %2003 = vmatprep.subr.bf16.mxu0 0
    %2004 = vmatpush1.bf16.msra.mxu0 %v854
    %2005 = vmatprep.subr.bf16.mxu0 0
    %2006 = vmatpush1.bf16.msra.mxu0 %v855
    %2007 = vmatprep.subr.bf16.mxu0 0
    %2008 = vmatpush1.bf16.msra.mxu0 %v856
    %2009 = vmatprep.subr.bf16.mxu0 0
    %2010 = vmatpush1.bf16.msra.mxu0 %v857
    %2011 = vmatprep.subr.bf16.mxu0 0
    %2012 = vmatpush1.bf16.msra.mxu0 %v858
    %2013 = vmatprep.subr.bf16.mxu0 0
    %2014 = vmatpush1.bf16.msra.mxu0 %v859
    %2015 = vmatprep.subr.bf16.mxu0 0
    %2016 = vmatpush1.bf16.msra.mxu0 %v860
    %2017 = vmatprep.mubr.bf16.mxu0 %v1807
    %2018 = vmatmul.mubr.bf16.gmra.mrb[0].mxu0 %v1806
    %v2019 = vpop.f32.mrb[0].mxu0
    %v2020 = vadd.f32 %v1980, %v2019
    %v2021 = vpop.f32.mrb[0].mxu0
    %v2022 = vpop.f32.mrb[0].mxu0
    %v2023 = vpop.f32.mrb[0].mxu0
    %2024 = vdwg.mxu0
    %2025 = vmatprep.subr.bf16.mxu0 0
    %2026 = vmatpush1.bf16.msra.mxu0 %v861
    %2027 = vmatprep.subr.bf16.mxu0 0
    %2028 = vmatpush1.bf16.msra.mxu0 %v862
    %2029 = vmatprep.subr.bf16.mxu0 0
    %2030 = vmatpush1.bf16.msra.mxu0 %v863
    %2031 = vmatprep.subr.bf16.mxu0 0
    %2032 = vmatpush1.bf16.msra.mxu0 %v864
    %2033 = vmatprep.subr.bf16.mxu0 0
    %2034 = vmatpush1.bf16.msra.mxu0 %v865
    %2035 = vmatprep.subr.bf16.mxu0 0
    %2036 = vmatpush1.bf16.msra.mxu0 %v866
    %2037 = vmatprep.subr.bf16.mxu0 0
    %2038 = vmatpush1.bf16.msra.mxu0 %v867
    %2039 = vmatprep.subr.bf16.mxu0 0
    %2040 = vmatpush1.bf16.msra.mxu0 %v868
    %2041 = vmatprep.subr.bf16.mxu0 0
    %2042 = vmatpush1.bf16.msra.mxu0 %v869
    %2043 = vmatprep.subr.bf16.mxu0 0
    %2044 = vmatpush1.bf16.msra.mxu0 %v870
    %2045 = vmatprep.subr.bf16.mxu0 0
    %2046 = vmatpush1.bf16.msra.mxu0 %v871
    %2047 = vmatprep.subr.bf16.mxu0 0
    %2048 = vmatpush1.bf16.msra.mxu0 %v872
    %2049 = vmatprep.subr.bf16.mxu0 0
    %2050 = vmatpush1.bf16.msra.mxu0 %v873
    %2051 = vmatprep.subr.bf16.mxu0 0
    %2052 = vmatpush1.bf16.msra.mxu0 %v874
    %2053 = vmatprep.subr.bf16.mxu0 0
    %2054 = vmatpush1.bf16.msra.mxu0 %v875
    %2055 = vmatprep.subr.bf16.mxu0 0
    %2056 = vmatpush1.bf16.msra.mxu0 %v876
    %2057 = vmatprep.mubr.bf16.mxu0 %v1809
    %2058 = vmatmul.mubr.bf16.gmra.mrb[0].mxu0 %v1808
    %v2059 = vpop.f32.mrb[0].mxu0
    %v2060 = vadd.f32 %v2020, %v2059
    %v2061 = vpop.f32.mrb[0].mxu0
    %v2062 = vpop.f32.mrb[0].mxu0
    %v2063 = vpop.f32.mrb[0].mxu0
    %2064 = vdwg.mxu0
    %2065 = vmatprep.subr.bf16.mxu0 0
    %2066 = vmatpush1.bf16.msra.mxu0 %v877
    %2067 = vmatprep.subr.bf16.mxu0 0
    %2068 = vmatpush1.bf16.msra.mxu0 %v878
    %2069 = vmatprep.subr.bf16.mxu0 0
    %2070 = vmatpush1.bf16.msra.mxu0 %v879
    %2071 = vmatprep.subr.bf16.mxu0 0
    %2072 = vmatpush1.bf16.msra.mxu0 %v880
    %2073 = vmatprep.subr.bf16.mxu0 0
    %2074 = vmatpush1.bf16.msra.mxu0 0
    %2075 = vmatprep.subr.bf16.mxu0 0
    %2076 = vmatpush1.bf16.msra.mxu0 0
    %2077 = vmatprep.subr.bf16.mxu0 0
    %2078 = vmatpush1.bf16.msra.mxu0 0
    %2079 = vmatprep.subr.bf16.mxu0 0
    %2080 = vmatpush1.bf16.msra.mxu0 0
    %2081 = vmatprep.subr.bf16.mxu0 0
    %2082 = vmatpush1.bf16.msra.mxu0 0
    %2083 = vmatprep.subr.bf16.mxu0 0
    %2084 = vmatpush1.bf16.msra.mxu0 0
    %2085 = vmatprep.subr.bf16.mxu0 0
    %2086 = vmatpush1.bf16.msra.mxu0 0
    %2087 = vmatprep.subr.bf16.mxu0 0
    %2088 = vmatpush1.bf16.msra.mxu0 0
    %2089 = vmatprep.subr.bf16.mxu0 0
    %2090 = vmatpush1.bf16.msra.mxu0 0
    %2091 = vmatprep.subr.bf16.mxu0 0
    %2092 = vmatpush1.bf16.msra.mxu0 0
    %2093 = vmatprep.subr.bf16.mxu0 0
    %2094 = vmatpush1.bf16.msra.mxu0 0
    %2095 = vmatprep.subr.bf16.mxu0 0
    %2096 = vmatpush1.bf16.msra.mxu0 0
    %2097 = vmatprep.mubr.bf16.mxu0 0
    %2098 = vmatmul.mubr.bf16.gmra.mrb[0].mxu0 %v1823
    %v2099 = vpop.f32.mrb[0].mxu0
    %v2100 = vadd.f32 %v2060, %v2099
    %v2101 = vpop.f32.mrb[0].mxu0
    %v2102 = vpop.f32.mrb[0].mxu0
    %v2103 = vpop.f32.mrb[0].mxu0
    %2104 = vdwg.mxu0
    %v2105 = vmax.f32 %v2100, 0.0
    %v2106 = vpack.c.bf16 %v2105, %v2105
    %v2107 = vld [vmem:[%s3 + $0x40] sm:$0xf]
    %v2108 = vld [vmem:[%s3 + $0x44] sm:$0xf]
    %v2109 = vld [vmem:[%s3 + $0x48] sm:$0xf]
    %v2110 = vld [vmem:[%s3 + $0x4c] sm:$0xf]
    %v2111 = vld [vmem:[%s3 + $0x50] sm:$0xf]
    %v2112 = vld [vmem:[%s3 + $0x54] sm:$0xf]
    %v2113 = vld [vmem:[%s3 + $0x58] sm:$0xf]
    %v2114 = vld [vmem:[%s3 + $0x5c] sm:$0xf]
    %v2123 = vunpack.c.l.b16 %v2107
    %v2124 = vunpack.c.l.b16 %v2108
    %v2125 = vunpack.c.l.b16 %v2109
    %v2126 = vunpack.c.l.b16 %v2110
    %v2127 = vunpack.c.l.b16 %v2111
    %v2128 = vunpack.c.l.b16 %v2112
    %v2129 = vunpack.c.l.b16 %v2113
    %v2130 = vunpack.c.l.b16 %v2114
    %v2131 = vpack.c.b16 %v2124, %v2123
    %v2132 = vpack.c.b16 %v2126, %v2125
    %v2133 = vpack.c.b16 %v2128, %v2127
    %v2134 = vpack.c.b16 %v2130, %v2129
    %v2140 = vsel %vm981, %v2106, 0
    %2142 = vmatprep.subr.bf16.mxu0 0
    %2143 = vmatpush1.bf16.msra.mxu0 %v2131
    %2144 = vmatprep.subr.bf16.mxu0 0
    %2145 = vmatpush1.bf16.msra.mxu0 %v2132
    %2146 = vmatprep.subr.bf16.mxu0 0
    %2147 = vmatpush1.bf16.msra.mxu0 %v2133
    %2148 = vmatprep.subr.bf16.mxu0 0
    %2149 = vmatpush1.bf16.msra.mxu0 %v2134
    %2150 = vmatprep.subr.bf16.mxu0 0
    %2151 = vmatpush1.bf16.msra.mxu0 0
    %2152 = vmatprep.subr.bf16.mxu0 0
    %2153 = vmatpush1.bf16.msra.mxu0 0
    %2154 = vmatprep.subr.bf16.mxu0 0
    %2155 = vmatpush1.bf16.msra.mxu0 0
    %2156 = vmatprep.subr.bf16.mxu0 0
    %2157 = vmatpush1.bf16.msra.mxu0 0
    %2158 = vmatprep.subr.bf16.mxu0 0
    %2159 = vmatpush1.bf16.msra.mxu0 0
    %2160 = vmatprep.subr.bf16.mxu0 0
    %2161 = vmatpush1.bf16.msra.mxu0 0
    %2162 = vmatprep.subr.bf16.mxu0 0
    %2163 = vmatpush1.bf16.msra.mxu0 0
    %2164 = vmatprep.subr.bf16.mxu0 0
    %2165 = vmatpush1.bf16.msra.mxu0 0
    %2166 = vmatprep.subr.bf16.mxu0 0
    %2167 = vmatpush1.bf16.msra.mxu0 0
    %2168 = vmatprep.subr.bf16.mxu0 0
    %2169 = vmatpush1.bf16.msra.mxu0 0
    %2170 = vmatprep.subr.bf16.mxu0 0
    %2171 = vmatpush1.bf16.msra.mxu0 0
    %2172 = vmatprep.subr.bf16.mxu0 0
    %2173 = vmatpush1.bf16.msra.mxu0 0
    %2174 = vmatprep.mubr.bf16.mxu0 0
    %2175 = vmatmul.mubr.bf16.gmra.mrb[0].mxu0 %v2140
    %v2176 = vpop.f32.mrb[0].mxu0
    %v2177 = vadd.f32 0.0, %v2176
    %v2178 = vpop.f32.mrb[0].mxu0
    %v2179 = vpop.f32.mrb[0].mxu0
    %v2180 = vpop.f32.mrb[0].mxu0
    %2181 = vdwg.mxu0
    %v2182 = vadd.f32 %v1765, %v2177
    %2185 = vrot.lane.b32.xlu0 %v159, 40
    %v2186 = vpop.permute.xlu0 %2185
    %2187 = vrot.lane.b32.xlu0 %v160, 40
    %v2188 = vpop.permute.xlu0 %2187
    %2189 = vrot.lane.b32.xlu0 %v161, 40
    %v2190 = vpop.permute.xlu0 %2189
    %2191 = vrot.lane.b32.xlu0 %v162, 40
    %v2192 = vpop.permute.xlu0 %2191
    %2193 = vrot.lane.b32.xlu0 %v163, 40
    %v2194 = vpop.permute.xlu0 %2193
    %2195 = vrot.lane.b32.xlu0 %v164, 40
    %v2196 = vpop.permute.xlu0 %2195
    %2197 = vrot.lane.b32.xlu0 %v165, 40
    %v2198 = vpop.permute.xlu0 %2197
    %2199 = vrot.lane.b32.xlu0 %v166, 40
    %v2200 = vpop.permute.xlu0 %2199
    %2201 = vrot.lane.b32.xlu0 %v167, 40
    %v2202 = vpop.permute.xlu0 %2201
    %2203 = vrot.lane.b32.xlu0 %v168, 40
    %v2204 = vpop.permute.xlu0 %2203
    %2205 = vrot.lane.b32.xlu0 %v169, 40
    %v2206 = vpop.permute.xlu0 %2205
    %2207 = vrot.lane.b32.xlu0 %v170, 40
    %v2208 = vpop.permute.xlu0 %2207
    %2209 = vrot.lane.b32.xlu0 %v171, 40
    %v2210 = vpop.permute.xlu0 %2209
    %2211 = vrot.lane.b32.xlu0 %v172, 40
    %v2212 = vpop.permute.xlu0 %2211
    %vm2213 = vcmask 326656
    %v2214 = vsel %vm2213, %v2186, %v2188
    %v2215 = vsel %vm2213, %v2188, %v2190
    %v2216 = vsel %vm2213, %v2190, %v2192
    %v2217 = vsel %vm2213, %v2192, %v2194
    %v2218 = vsel %vm2213, %v2194, %v2196
    %v2219 = vsel %vm2213, %v2196, %v2198
    %v2220 = vsel %vm2213, %v2198, %v2200
    %v2221 = vsel %vm2213, %v2200, %v2202
    %v2222 = vsel %vm2213, %v2202, %v2204
    %v2223 = vsel %vm2213, %v2204, %v2206
    %v2224 = vsel %vm2213, %v2206, %v2208
    %v2225 = vsel %vm2213, %v2208, %v2210
    %v2226 = vsel %vm2213, %v2210, %v2212
    %v2240 = vsel %vm981, %v2226, 0
    %2242 = vmatprep.subr.bf16.mxu0 0
    %2243 = vmatpush1.bf16.msra.mxu0 %v781
    %2244 = vmatprep.subr.bf16.mxu0 0
    %2245 = vmatpush1.bf16.msra.mxu0 %v782
    %2246 = vmatprep.subr.bf16.mxu0 0
    %2247 = vmatpush1.bf16.msra.mxu0 %v783
    %2248 = vmatprep.subr.bf16.mxu0 0
    %2249 = vmatpush1.bf16.msra.mxu0 %v784
    %2250 = vmatprep.subr.bf16.mxu0 0
    %2251 = vmatpush1.bf16.msra.mxu0 %v785
    %2252 = vmatprep.subr.bf16.mxu0 0
    %2253 = vmatpush1.bf16.msra.mxu0 %v786
    %2254 = vmatprep.subr.bf16.mxu0 0
    %2255 = vmatpush1.bf16.msra.mxu0 %v787
    %2256 = vmatprep.subr.bf16.mxu0 0
    %2257 = vmatpush1.bf16.msra.mxu0 %v788
    %2258 = vmatprep.subr.bf16.mxu0 0
    %2259 = vmatpush1.bf16.msra.mxu0 %v789
    %2260 = vmatprep.subr.bf16.mxu0 0
    %2261 = vmatpush1.bf16.msra.mxu0 %v790
    %2262 = vmatprep.subr.bf16.mxu0 0
    %2263 = vmatpush1.bf16.msra.mxu0 %v791
    %2264 = vmatprep.subr.bf16.mxu0 0
    %2265 = vmatpush1.bf16.msra.mxu0 %v792
    %2266 = vmatprep.subr.bf16.mxu0 0
    %2267 = vmatpush1.bf16.msra.mxu0 %v793
    %2268 = vmatprep.subr.bf16.mxu0 0
    %2269 = vmatpush1.bf16.msra.mxu0 %v794
    %2270 = vmatprep.subr.bf16.mxu0 0
    %2271 = vmatpush1.bf16.msra.mxu0 %v795
    %2272 = vmatprep.subr.bf16.mxu0 0
    %2273 = vmatpush1.bf16.msra.mxu0 %v796
    %2274 = vmatprep.mubr.bf16.mxu0 %v2215
    %2275 = vmatmul.mubr.bf16.gmra.mrb[0].mxu0 %v2214
    %v2276 = vpop.f32.mrb[0].mxu0
    %v2277 = vadd.f32 %v379, %v2276
    %v2278 = vpop.f32.mrb[0].mxu0
    %v2279 = vpop.f32.mrb[0].mxu0
    %v2280 = vpop.f32.mrb[0].mxu0
    %2281 = vdwg.mxu0
    %2282 = vmatprep.subr.bf16.mxu0 0
    %2283 = vmatpush1.bf16.msra.mxu0 %v797
    %2284 = vmatprep.subr.bf16.mxu0 0
    %2285 = vmatpush1.bf16.msra.mxu0 %v798
    %2286 = vmatprep.subr.bf16.mxu0 0
    %2287 = vmatpush1.bf16.msra.mxu0 %v799
    %2288 = vmatprep.subr.bf16.mxu0 0
    %2289 = vmatpush1.bf16.msra.mxu0 %v800
    %2290 = vmatprep.subr.bf16.mxu0 0
    %2291 = vmatpush1.bf16.msra.mxu0 %v801
    %2292 = vmatprep.subr.bf16.mxu0 0
    %2293 = vmatpush1.bf16.msra.mxu0 %v802
    %2294 = vmatprep.subr.bf16.mxu0 0
    %2295 = vmatpush1.bf16.msra.mxu0 %v803
    %2296 = vmatprep.subr.bf16.mxu0 0
    %2297 = vmatpush1.bf16.msra.mxu0 %v804
    %2298 = vmatprep.subr.bf16.mxu0 0
    %2299 = vmatpush1.bf16.msra.mxu0 %v805
    %2300 = vmatprep.subr.bf16.mxu0 0
    %2301 = vmatpush1.bf16.msra.mxu0 %v806
    %2302 = vmatprep.subr.bf16.mxu0 0
    %2303 = vmatpush1.bf16.msra.mxu0 %v807
    %2304 = vmatprep.subr.bf16.mxu0 0
    %2305 = vmatpush1.bf16.msra.mxu0 %v808
    %2306 = vmatprep.subr.bf16.mxu0 0
    %2307 = vmatpush1.bf16.msra.mxu0 %v809
    %2308 = vmatprep.subr.bf16.mxu0 0
    %2309 = vmatpush1.bf16.msra.mxu0 %v810
    %2310 = vmatprep.subr.bf16.mxu0 0
    %2311 = vmatpush1.bf16.msra.mxu0 %v811
    %2312 = vmatprep.subr.bf16.mxu0 0
    %2313 = vmatpush1.bf16.msra.mxu0 %v812
    %2314 = vmatprep.mubr.bf16.mxu0 %v2217
    %2315 = vmatmul.mubr.bf16.gmra.mrb[0].mxu0 %v2216
    %v2316 = vpop.f32.mrb[0].mxu0
    %v2317 = vadd.f32 %v2277, %v2316
    %v2318 = vpop.f32.mrb[0].mxu0
    %v2319 = vpop.f32.mrb[0].mxu0
    %v2320 = vpop.f32.mrb[0].mxu0
    %2321 = vdwg.mxu0
    %2322 = vmatprep.subr.bf16.mxu0 0
    %2323 = vmatpush1.bf16.msra.mxu0 %v813
    %2324 = vmatprep.subr.bf16.mxu0 0
    %2325 = vmatpush1.bf16.msra.mxu0 %v814
    %2326 = vmatprep.subr.bf16.mxu0 0
    %2327 = vmatpush1.bf16.msra.mxu0 %v815
    %2328 = vmatprep.subr.bf16.mxu0 0
    %2329 = vmatpush1.bf16.msra.mxu0 %v816
    %2330 = vmatprep.subr.bf16.mxu0 0
    %2331 = vmatpush1.bf16.msra.mxu0 %v817
    %2332 = vmatprep.subr.bf16.mxu0 0
    %2333 = vmatpush1.bf16.msra.mxu0 %v818
    %2334 = vmatprep.subr.bf16.mxu0 0
    %2335 = vmatpush1.bf16.msra.mxu0 %v819
    %2336 = vmatprep.subr.bf16.mxu0 0
    %2337 = vmatpush1.bf16.msra.mxu0 %v820
    %2338 = vmatprep.subr.bf16.mxu0 0
    %2339 = vmatpush1.bf16.msra.mxu0 %v821
    %2340 = vmatprep.subr.bf16.mxu0 0
    %2341 = vmatpush1.bf16.msra.mxu0 %v822
    %2342 = vmatprep.subr.bf16.mxu0 0
    %2343 = vmatpush1.bf16.msra.mxu0 %v823
    %2344 = vmatprep.subr.bf16.mxu0 0
    %2345 = vmatpush1.bf16.msra.mxu0 %v824
    %2346 = vmatprep.subr.bf16.mxu0 0
    %2347 = vmatpush1.bf16.msra.mxu0 %v825
    %2348 = vmatprep.subr.bf16.mxu0 0
    %2349 = vmatpush1.bf16.msra.mxu0 %v826
    %2350 = vmatprep.subr.bf16.mxu0 0
    %2351 = vmatpush1.bf16.msra.mxu0 %v827
    %2352 = vmatprep.subr.bf16.mxu0 0
    %2353 = vmatpush1.bf16.msra.mxu0 %v828
    %2354 = vmatprep.mubr.bf16.mxu0 %v2219
    %2355 = vmatmul.mubr.bf16.gmra.mrb[0].mxu0 %v2218
    %v2356 = vpop.f32.mrb[0].mxu0
    %v2357 = vadd.f32 %v2317, %v2356
    %v2358 = vpop.f32.mrb[0].mxu0
    %v2359 = vpop.f32.mrb[0].mxu0
    %v2360 = vpop.f32.mrb[0].mxu0
    %2361 = vdwg.mxu0
    %2362 = vmatprep.subr.bf16.mxu0 0
    %2363 = vmatpush1.bf16.msra.mxu0 %v829
    %2364 = vmatprep.subr.bf16.mxu0 0
    %2365 = vmatpush1.bf16.msra.mxu0 %v830
    %2366 = vmatprep.subr.bf16.mxu0 0
    %2367 = vmatpush1.bf16.msra.mxu0 %v831
    %2368 = vmatprep.subr.bf16.mxu0 0
    %2369 = vmatpush1.bf16.msra.mxu0 %v832
    %2370 = vmatprep.subr.bf16.mxu0 0
    %2371 = vmatpush1.bf16.msra.mxu0 %v833
    %2372 = vmatprep.subr.bf16.mxu0 0
    %2373 = vmatpush1.bf16.msra.mxu0 %v834
    %2374 = vmatprep.subr.bf16.mxu0 0
    %2375 = vmatpush1.bf16.msra.mxu0 %v835
    %2376 = vmatprep.subr.bf16.mxu0 0
    %2377 = vmatpush1.bf16.msra.mxu0 %v836
    %2378 = vmatprep.subr.bf16.mxu0 0
    %2379 = vmatpush1.bf16.msra.mxu0 %v837
    %2380 = vmatprep.subr.bf16.mxu0 0
    %2381 = vmatpush1.bf16.msra.mxu0 %v838
    %2382 = vmatprep.subr.bf16.mxu0 0
    %2383 = vmatpush1.bf16.msra.mxu0 %v839
    %2384 = vmatprep.subr.bf16.mxu0 0
    %2385 = vmatpush1.bf16.msra.mxu0 %v840
    %2386 = vmatprep.subr.bf16.mxu0 0
    %2387 = vmatpush1.bf16.msra.mxu0 %v841
    %2388 = vmatprep.subr.bf16.mxu0 0
    %2389 = vmatpush1.bf16.msra.mxu0 %v842
    %2390 = vmatprep.subr.bf16.mxu0 0
    %2391 = vmatpush1.bf16.msra.mxu0 %v843
    %2392 = vmatprep.subr.bf16.mxu0 0
    %2393 = vmatpush1.bf16.msra.mxu0 %v844
    %2394 = vmatprep.mubr.bf16.mxu0 %v2221
    %2395 = vmatmul.mubr.bf16.gmra.mrb[0].mxu0 %v2220
    %v2396 = vpop.f32.mrb[0].mxu0
    %v2397 = vadd.f32 %v2357, %v2396
    %v2398 = vpop.f32.mrb[0].mxu0
    %v2399 = vpop.f32.mrb[0].mxu0
    %v2400 = vpop.f32.mrb[0].mxu0
    %2401 = vdwg.mxu0
    %2402 = vmatprep.subr.bf16.mxu0 0
    %2403 = vmatpush1.bf16.msra.mxu0 %v845
    %2404 = vmatprep.subr.bf16.mxu0 0
    %2405 = vmatpush1.bf16.msra.mxu0 %v846
    %2406 = vmatprep.subr.bf16.mxu0 0
    %2407 = vmatpush1.bf16.msra.mxu0 %v847
    %2408 = vmatprep.subr.bf16.mxu0 0
    %2409 = vmatpush1.bf16.msra.mxu0 %v848
    %2410 = vmatprep.subr.bf16.mxu0 0
    %2411 = vmatpush1.bf16.msra.mxu0 %v849
    %2412 = vmatprep.subr.bf16.mxu0 0
    %2413 = vmatpush1.bf16.msra.mxu0 %v850
    %2414 = vmatprep.subr.bf16.mxu0 0
    %2415 = vmatpush1.bf16.msra.mxu0 %v851
    %2416 = vmatprep.subr.bf16.mxu0 0
    %2417 = vmatpush1.bf16.msra.mxu0 %v852
    %2418 = vmatprep.subr.bf16.mxu0 0
    %2419 = vmatpush1.bf16.msra.mxu0 %v853
    %2420 = vmatprep.subr.bf16.mxu0 0
    %2421 = vmatpush1.bf16.msra.mxu0 %v854
    %2422 = vmatprep.subr.bf16.mxu0 0
    %2423 = vmatpush1.bf16.msra.mxu0 %v855
    %2424 = vmatprep.subr.bf16.mxu0 0
    %2425 = vmatpush1.bf16.msra.mxu0 %v856
    %2426 = vmatprep.subr.bf16.mxu0 0
    %2427 = vmatpush1.bf16.msra.mxu0 %v857
    %2428 = vmatprep.subr.bf16.mxu0 0
    %2429 = vmatpush1.bf16.msra.mxu0 %v858
    %2430 = vmatprep.subr.bf16.mxu0 0
    %2431 = vmatpush1.bf16.msra.mxu0 %v859
    %2432 = vmatprep.subr.bf16.mxu0 0
    %2433 = vmatpush1.bf16.msra.mxu0 %v860
    %2434 = vmatprep.mubr.bf16.mxu0 %v2223
    %2435 = vmatmul.mubr.bf16.gmra.mrb[0].mxu0 %v2222
    %v2436 = vpop.f32.mrb[0].mxu0
    %v2437 = vadd.f32 %v2397, %v2436
    %v2438 = vpop.f32.mrb[0].mxu0
    %v2439 = vpop.f32.mrb[0].mxu0
    %v2440 = vpop.f32.mrb[0].mxu0
    %2441 = vdwg.mxu0
    %2442 = vmatprep.subr.bf16.mxu0 0
    %2443 = vmatpush1.bf16.msra.mxu0 %v861
    %2444 = vmatprep.subr.bf16.mxu0 0
    %2445 = vmatpush1.bf16.msra.mxu0 %v862
    %2446 = vmatprep.subr.bf16.mxu0 0
    %2447 = vmatpush1.bf16.msra.mxu0 %v863
    %2448 = vmatprep.subr.bf16.mxu0 0
    %2449 = vmatpush1.bf16.msra.mxu0 %v864
    %2450 = vmatprep.subr.bf16.mxu0 0
    %2451 = vmatpush1.bf16.msra.mxu0 %v865
    %2452 = vmatprep.subr.bf16.mxu0 0
    %2453 = vmatpush1.bf16.msra.mxu0 %v866
    %2454 = vmatprep.subr.bf16.mxu0 0
    %2455 = vmatpush1.bf16.msra.mxu0 %v867
    %2456 = vmatprep.subr.bf16.mxu0 0
    %2457 = vmatpush1.bf16.msra.mxu0 %v868
    %2458 = vmatprep.subr.bf16.mxu0 0
    %2459 = vmatpush1.bf16.msra.mxu0 %v869
    %2460 = vmatprep.subr.bf16.mxu0 0
    %2461 = vmatpush1.bf16.msra.mxu0 %v870
    %2462 = vmatprep.subr.bf16.mxu0 0
    %2463 = vmatpush1.bf16.msra.mxu0 %v871
    %2464 = vmatprep.subr.bf16.mxu0 0
    %2465 = vmatpush1.bf16.msra.mxu0 %v872
    %2466 = vmatprep.subr.bf16.mxu0 0
    %2467 = vmatpush1.bf16.msra.mxu0 %v873
    %2468 = vmatprep.subr.bf16.mxu0 0
    %2469 = vmatpush1.bf16.msra.mxu0 %v874
    %2470 = vmatprep.subr.bf16.mxu0 0
    %2471 = vmatpush1.bf16.msra.mxu0 %v875
    %2472 = vmatprep.subr.bf16.mxu0 0
    %2473 = vmatpush1.bf16.msra.mxu0 %v876
    %2474 = vmatprep.mubr.bf16.mxu0 %v2225
    %2475 = vmatmul.mubr.bf16.gmra.mrb[0].mxu0 %v2224
    %v2476 = vpop.f32.mrb[0].mxu0
    %v2477 = vadd.f32 %v2437, %v2476
    %v2478 = vpop.f32.mrb[0].mxu0
    %v2479 = vpop.f32.mrb[0].mxu0
    %v2480 = vpop.f32.mrb[0].mxu0
    %2481 = vdwg.mxu0
    %2482 = vmatprep.subr.bf16.mxu0 0
    %2483 = vmatpush1.bf16.msra.mxu0 %v877
    %2484 = vmatprep.subr.bf16.mxu0 0
    %2485 = vmatpush1.bf16.msra.mxu0 %v878
    %2486 = vmatprep.subr.bf16.mxu0 0
    %2487 = vmatpush1.bf16.msra.mxu0 %v879
    %2488 = vmatprep.subr.bf16.mxu0 0
    %2489 = vmatpush1.bf16.msra.mxu0 %v880
    %2490 = vmatprep.subr.bf16.mxu0 0
    %2491 = vmatpush1.bf16.msra.mxu0 0
    %2492 = vmatprep.subr.bf16.mxu0 0
    %2493 = vmatpush1.bf16.msra.mxu0 0
    %2494 = vmatprep.subr.bf16.mxu0 0
    %2495 = vmatpush1.bf16.msra.mxu0 0
    %2496 = vmatprep.subr.bf16.mxu0 0
    %2497 = vmatpush1.bf16.msra.mxu0 0
    %2498 = vmatprep.subr.bf16.mxu0 0
    %2499 = vmatpush1.bf16.msra.mxu0 0
    %2500 = vmatprep.subr.bf16.mxu0 0
    %2501 = vmatpush1.bf16.msra.mxu0 0
    %2502 = vmatprep.subr.bf16.mxu0 0
    %2503 = vmatpush1.bf16.msra.mxu0 0
    %2504 = vmatprep.subr.bf16.mxu0 0
    %2505 = vmatpush1.bf16.msra.mxu0 0
    %2506 = vmatprep.subr.bf16.mxu0 0
    %2507 = vmatpush1.bf16.msra.mxu0 0
    %2508 = vmatprep.subr.bf16.mxu0 0
    %2509 = vmatpush1.bf16.msra.mxu0 0
    %2510 = vmatprep.subr.bf16.mxu0 0
    %2511 = vmatpush1.bf16.msra.mxu0 0
    %2512 = vmatprep.subr.bf16.mxu0 0
    %2513 = vmatpush1.bf16.msra.mxu0 0
    %2514 = vmatprep.mubr.bf16.mxu0 0
    %2515 = vmatmul.mubr.bf16.gmra.mrb[0].mxu0 %v2240
    %v2516 = vpop.f32.mrb[0].mxu0
    %v2517 = vadd.f32 %v2477, %v2516
    %v2518 = vpop.f32.mrb[0].mxu0
    %v2519 = vpop.f32.mrb[0].mxu0
    %v2520 = vpop.f32.mrb[0].mxu0
    %2521 = vdwg.mxu0
    %v2522 = vmax.f32 %v2517, 0.0
    %v2523 = vpack.c.bf16 %v2522, %v2522
    %v2524 = vld [vmem:[%s3 + $0x60] sm:$0xf]
    %v2525 = vld [vmem:[%s3 + $0x64] sm:$0xf]
    %v2526 = vld [vmem:[%s3 + $0x68] sm:$0xf]
    %v2527 = vld [vmem:[%s3 + $0x6c] sm:$0xf]
    %v2528 = vld [vmem:[%s3 + $0x70] sm:$0xf]
    %v2529 = vld [vmem:[%s3 + $0x74] sm:$0xf]
    %v2530 = vld [vmem:[%s3 + $0x78] sm:$0xf]
    %v2531 = vld [vmem:[%s3 + $0x7c] sm:$0xf]
    %v2540 = vunpack.c.l.b16 %v2524
    %v2541 = vunpack.c.l.b16 %v2525
    %v2542 = vunpack.c.l.b16 %v2526
    %v2543 = vunpack.c.l.b16 %v2527
    %v2544 = vunpack.c.l.b16 %v2528
    %v2545 = vunpack.c.l.b16 %v2529
    %v2546 = vunpack.c.l.b16 %v2530
    %v2547 = vunpack.c.l.b16 %v2531
    %v2548 = vpack.c.b16 %v2541, %v2540
    %v2549 = vpack.c.b16 %v2543, %v2542
    %v2550 = vpack.c.b16 %v2545, %v2544
    %v2551 = vpack.c.b16 %v2547, %v2546
    %v2557 = vsel %vm981, %v2523, 0
    %2559 = vmatprep.subr.bf16.mxu0 0
    %2560 = vmatpush1.bf16.msra.mxu0 %v2548
    %2561 = vmatprep.subr.bf16.mxu0 0
    %2562 = vmatpush1.bf16.msra.mxu0 %v2549
    %2563 = vmatprep.subr.bf16.mxu0 0
    %2564 = vmatpush1.bf16.msra.mxu0 %v2550
    %2565 = vmatprep.subr.bf16.mxu0 0
    %2566 = vmatpush1.bf16.msra.mxu0 %v2551
    %2567 = vmatprep.subr.bf16.mxu0 0
    %2568 = vmatpush1.bf16.msra.mxu0 0
    %2569 = vmatprep.subr.bf16.mxu0 0
    %2570 = vmatpush1.bf16.msra.mxu0 0
    %2571 = vmatprep.subr.bf16.mxu0 0
    %2572 = vmatpush1.bf16.msra.mxu0 0
    %2573 = vmatprep.subr.bf16.mxu0 0
    %2574 = vmatpush1.bf16.msra.mxu0 0
    %2575 = vmatprep.subr.bf16.mxu0 0
    %2576 = vmatpush1.bf16.msra.mxu0 0
    %2577 = vmatprep.subr.bf16.mxu0 0
    %2578 = vmatpush1.bf16.msra.mxu0 0
    %2579 = vmatprep.subr.bf16.mxu0 0
    %2580 = vmatpush1.bf16.msra.mxu0 0
    %2581 = vmatprep.subr.bf16.mxu0 0
    %2582 = vmatpush1.bf16.msra.mxu0 0
    %2583 = vmatprep.subr.bf16.mxu0 0
    %2584 = vmatpush1.bf16.msra.mxu0 0
    %2585 = vmatprep.subr.bf16.mxu0 0
    %2586 = vmatpush1.bf16.msra.mxu0 0
    %2587 = vmatprep.subr.bf16.mxu0 0
    %2588 = vmatpush1.bf16.msra.mxu0 0
    %2589 = vmatprep.subr.bf16.mxu0 0
    %2590 = vmatpush1.bf16.msra.mxu0 0
    %2591 = vmatprep.mubr.bf16.mxu0 0
    %2592 = vmatmul.mubr.bf16.gmra.mrb[0].mxu0 %v2557
    %v2593 = vpop.f32.mrb[0].mxu0
    %v2594 = vadd.f32 0.0, %v2593
    %v2595 = vpop.f32.mrb[0].mxu0
    %v2596 = vpop.f32.mrb[0].mxu0
    %v2597 = vpop.f32.mrb[0].mxu0
    %2598 = vdwg.mxu0
    %v2599 = vadd.f32 %v2182, %v2594
    %2601 = vrot.lane.b32.xlu0 %v161, 96
    %v2602 = vpop.permute.xlu0 %2601
    %2603 = vrot.lane.b32.xlu0 %v162, 96
    %v2604 = vpop.permute.xlu0 %2603
    %2605 = vrot.lane.b32.xlu0 %v163, 96
    %v2606 = vpop.permute.xlu0 %2605
    %2607 = vrot.lane.b32.xlu0 %v164, 96
    %v2608 = vpop.permute.xlu0 %2607
    %2609 = vrot.lane.b32.xlu0 %v165, 96
    %v2610 = vpop.permute.xlu0 %2609
    %2611 = vrot.lane.b32.xlu0 %v166, 96
    %v2612 = vpop.permute.xlu0 %2611
    %2613 = vrot.lane.b32.xlu0 %v167, 96
    %v2614 = vpop.permute.xlu0 %2613
    %2615 = vrot.lane.b32.xlu0 %v168, 96
    %v2616 = vpop.permute.xlu0 %2615
    %2617 = vrot.lane.b32.xlu0 %v169, 96
    %v2618 = vpop.permute.xlu0 %2617
    %2619 = vrot.lane.b32.xlu0 %v170, 96
    %v2620 = vpop.permute.xlu0 %2619
    %2621 = vrot.lane.b32.xlu0 %v171, 96
    %v2622 = vpop.permute.xlu0 %2621
    %2623 = vrot.lane.b32.xlu0 %v172, 96
    %v2624 = vpop.permute.xlu0 %2623
    %2625 = vrot.lane.b32.xlu0 %v173, 96
    %v2626 = vpop.permute.xlu0 %2625
    %vm2627 = vcmask 785408
    %v2628 = vsel %vm2627, %v2602, %v2604
    %v2629 = vsel %vm2627, %v2604, %v2606
    %v2630 = vsel %vm2627, %v2606, %v2608
    %v2631 = vsel %vm2627, %v2608, %v2610
    %v2632 = vsel %vm2627, %v2610, %v2612
    %v2633 = vsel %vm2627, %v2612, %v2614
    %v2634 = vsel %vm2627, %v2614, %v2616
    %v2635 = vsel %vm2627, %v2616, %v2618
    %v2636 = vsel %vm2627, %v2618, %v2620
    %v2637 = vsel %vm2627, %v2620, %v2622
    %v2638 = vsel %vm2627, %v2622, %v2624
    %v2639 = vsel %vm2627, %v2624, %v2626
    %v2653 = vsel %vm981, %v2626, 0
    %2655 = vmatprep.subr.bf16.mxu0 0
    %2656 = vmatpush1.bf16.msra.mxu0 %v781
    %2657 = vmatprep.subr.bf16.mxu0 0
    %2658 = vmatpush1.bf16.msra.mxu0 %v782
    %2659 = vmatprep.subr.bf16.mxu0 0
    %2660 = vmatpush1.bf16.msra.mxu0 %v783
    %2661 = vmatprep.subr.bf16.mxu0 0
    %2662 = vmatpush1.bf16.msra.mxu0 %v784
    %2663 = vmatprep.subr.bf16.mxu0 0
    %2664 = vmatpush1.bf16.msra.mxu0 %v785
    %2665 = vmatprep.subr.bf16.mxu0 0
    %2666 = vmatpush1.bf16.msra.mxu0 %v786
    %2667 = vmatprep.subr.bf16.mxu0 0
    %2668 = vmatpush1.bf16.msra.mxu0 %v787
    %2669 = vmatprep.subr.bf16.mxu0 0
    %2670 = vmatpush1.bf16.msra.mxu0 %v788
    %2671 = vmatprep.subr.bf16.mxu0 0
    %2672 = vmatpush1.bf16.msra.mxu0 %v789
    %2673 = vmatprep.subr.bf16.mxu0 0
    %2674 = vmatpush1.bf16.msra.mxu0 %v790
    %2675 = vmatprep.subr.bf16.mxu0 0
    %2676 = vmatpush1.bf16.msra.mxu0 %v791
    %2677 = vmatprep.subr.bf16.mxu0 0
    %2678 = vmatpush1.bf16.msra.mxu0 %v792
    %2679 = vmatprep.subr.bf16.mxu0 0
    %2680 = vmatpush1.bf16.msra.mxu0 %v793
    %2681 = vmatprep.subr.bf16.mxu0 0
    %2682 = vmatpush1.bf16.msra.mxu0 %v794
    %2683 = vmatprep.subr.bf16.mxu0 0
    %2684 = vmatpush1.bf16.msra.mxu0 %v795
    %2685 = vmatprep.subr.bf16.mxu0 0
    %2686 = vmatpush1.bf16.msra.mxu0 %v796
    %2687 = vmatprep.mubr.bf16.mxu0 %v2629
    %2688 = vmatmul.mubr.bf16.gmra.mrb[0].mxu0 %v2628
    %v2689 = vpop.f32.mrb[0].mxu0
    %v2690 = vadd.f32 %v379, %v2689
    %v2691 = vpop.f32.mrb[0].mxu0
    %v2692 = vpop.f32.mrb[0].mxu0
    %v2693 = vpop.f32.mrb[0].mxu0
    %2694 = vdwg.mxu0
    %2695 = vmatprep.subr.bf16.mxu0 0
    %2696 = vmatpush1.bf16.msra.mxu0 %v797
    %2697 = vmatprep.subr.bf16.mxu0 0
    %2698 = vmatpush1.bf16.msra.mxu0 %v798
    %2699 = vmatprep.subr.bf16.mxu0 0
    %2700 = vmatpush1.bf16.msra.mxu0 %v799
    %2701 = vmatprep.subr.bf16.mxu0 0
    %2702 = vmatpush1.bf16.msra.mxu0 %v800
    %2703 = vmatprep.subr.bf16.mxu0 0
    %2704 = vmatpush1.bf16.msra.mxu0 %v801
    %2705 = vmatprep.subr.bf16.mxu0 0
    %2706 = vmatpush1.bf16.msra.mxu0 %v802
    %2707 = vmatprep.subr.bf16.mxu0 0
    %2708 = vmatpush1.bf16.msra.mxu0 %v803
    %2709 = vmatprep.subr.bf16.mxu0 0
    %2710 = vmatpush1.bf16.msra.mxu0 %v804
    %2711 = vmatprep.subr.bf16.mxu0 0
    %2712 = vmatpush1.bf16.msra.mxu0 %v805
    %2713 = vmatprep.subr.bf16.mxu0 0
    %2714 = vmatpush1.bf16.msra.mxu0 %v806
    %2715 = vmatprep.subr.bf16.mxu0 0
    %2716 = vmatpush1.bf16.msra.mxu0 %v807
    %2717 = vmatprep.subr.bf16.mxu0 0
    %2718 = vmatpush1.bf16.msra.mxu0 %v808
    %2719 = vmatprep.subr.bf16.mxu0 0
    %2720 = vmatpush1.bf16.msra.mxu0 %v809
    %2721 = vmatprep.subr.bf16.mxu0 0
    %2722 = vmatpush1.bf16.msra.mxu0 %v810
    %2723 = vmatprep.subr.bf16.mxu0 0
    %2724 = vmatpush1.bf16.msra.mxu0 %v811
    %2725 = vmatprep.subr.bf16.mxu0 0
    %2726 = vmatpush1.bf16.msra.mxu0 %v812
    %2727 = vmatprep.mubr.bf16.mxu0 %v2631
    %2728 = vmatmul.mubr.bf16.gmra.mrb[0].mxu0 %v2630
    %v2729 = vpop.f32.mrb[0].mxu0
    %v2730 = vadd.f32 %v2690, %v2729
    %v2731 = vpop.f32.mrb[0].mxu0
    %v2732 = vpop.f32.mrb[0].mxu0
    %v2733 = vpop.f32.mrb[0].mxu0
    %2734 = vdwg.mxu0
    %2735 = vmatprep.subr.bf16.mxu0 0
    %2736 = vmatpush1.bf16.msra.mxu0 %v813
    %2737 = vmatprep.subr.bf16.mxu0 0
    %2738 = vmatpush1.bf16.msra.mxu0 %v814
    %2739 = vmatprep.subr.bf16.mxu0 0
    %2740 = vmatpush1.bf16.msra.mxu0 %v815
    %2741 = vmatprep.subr.bf16.mxu0 0
    %2742 = vmatpush1.bf16.msra.mxu0 %v816
    %2743 = vmatprep.subr.bf16.mxu0 0
    %2744 = vmatpush1.bf16.msra.mxu0 %v817
    %2745 = vmatprep.subr.bf16.mxu0 0
    %2746 = vmatpush1.bf16.msra.mxu0 %v818
    %2747 = vmatprep.subr.bf16.mxu0 0
    %2748 = vmatpush1.bf16.msra.mxu0 %v819
    %2749 = vmatprep.subr.bf16.mxu0 0
    %2750 = vmatpush1.bf16.msra.mxu0 %v820
    %2751 = vmatprep.subr.bf16.mxu0 0
    %2752 = vmatpush1.bf16.msra.mxu0 %v821
    %2753 = vmatprep.subr.bf16.mxu0 0
    %2754 = vmatpush1.bf16.msra.mxu0 %v822
    %2755 = vmatprep.subr.bf16.mxu0 0
    %2756 = vmatpush1.bf16.msra.mxu0 %v823
    %2757 = vmatprep.subr.bf16.mxu0 0
    %2758 = vmatpush1.bf16.msra.mxu0 %v824
    %2759 = vmatprep.subr.bf16.mxu0 0
    %2760 = vmatpush1.bf16.msra.mxu0 %v825
    %2761 = vmatprep.subr.bf16.mxu0 0
    %2762 = vmatpush1.bf16.msra.mxu0 %v826
    %2763 = vmatprep.subr.bf16.mxu0 0
    %2764 = vmatpush1.bf16.msra.mxu0 %v827
    %2765 = vmatprep.subr.bf16.mxu0 0
    %2766 = vmatpush1.bf16.msra.mxu0 %v828
    %2767 = vmatprep.mubr.bf16.mxu0 %v2633
    %2768 = vmatmul.mubr.bf16.gmra.mrb[0].mxu0 %v2632
    %v2769 = vpop.f32.mrb[0].mxu0
    %v2770 = vadd.f32 %v2730, %v2769
    %v2771 = vpop.f32.mrb[0].mxu0
    %v2772 = vpop.f32.mrb[0].mxu0
    %v2773 = vpop.f32.mrb[0].mxu0
    %2774 = vdwg.mxu0
    %2775 = vmatprep.subr.bf16.mxu0 0
    %2776 = vmatpush1.bf16.msra.mxu0 %v829
    %2777 = vmatprep.subr.bf16.mxu0 0
    %2778 = vmatpush1.bf16.msra.mxu0 %v830
    %2779 = vmatprep.subr.bf16.mxu0 0
    %2780 = vmatpush1.bf16.msra.mxu0 %v831
    %2781 = vmatprep.subr.bf16.mxu0 0
    %2782 = vmatpush1.bf16.msra.mxu0 %v832
    %2783 = vmatprep.subr.bf16.mxu0 0
    %2784 = vmatpush1.bf16.msra.mxu0 %v833
    %2785 = vmatprep.subr.bf16.mxu0 0
    %2786 = vmatpush1.bf16.msra.mxu0 %v834
    %2787 = vmatprep.subr.bf16.mxu0 0
    %2788 = vmatpush1.bf16.msra.mxu0 %v835
    %2789 = vmatprep.subr.bf16.mxu0 0
    %2790 = vmatpush1.bf16.msra.mxu0 %v836
    %2791 = vmatprep.subr.bf16.mxu0 0
    %2792 = vmatpush1.bf16.msra.mxu0 %v837
    %2793 = vmatprep.subr.bf16.mxu0 0
    %2794 = vmatpush1.bf16.msra.mxu0 %v838
    %2795 = vmatprep.subr.bf16.mxu0 0
    %2796 = vmatpush1.bf16.msra.mxu0 %v839
    %2797 = vmatprep.subr.bf16.mxu0 0
    %2798 = vmatpush1.bf16.msra.mxu0 %v840
    %2799 = vmatprep.subr.bf16.mxu0 0
    %2800 = vmatpush1.bf16.msra.mxu0 %v841
    %2801 = vmatprep.subr.bf16.mxu0 0
    %2802 = vmatpush1.bf16.msra.mxu0 %v842
    %2803 = vmatprep.subr.bf16.mxu0 0
    %2804 = vmatpush1.bf16.msra.mxu0 %v843
    %2805 = vmatprep.subr.bf16.mxu0 0
    %2806 = vmatpush1.bf16.msra.mxu0 %v844
    %2807 = vmatprep.mubr.bf16.mxu0 %v2635
    %2808 = vmatmul.mubr.bf16.gmra.mrb[0].mxu0 %v2634
    %v2809 = vpop.f32.mrb[0].mxu0
    %v2810 = vadd.f32 %v2770, %v2809
    %v2811 = vpop.f32.mrb[0].mxu0
    %v2812 = vpop.f32.mrb[0].mxu0
    %v2813 = vpop.f32.mrb[0].mxu0
    %2814 = vdwg.mxu0
    %2815 = vmatprep.subr.bf16.mxu0 0
    %2816 = vmatpush1.bf16.msra.mxu0 %v845
    %2817 = vmatprep.subr.bf16.mxu0 0
    %2818 = vmatpush1.bf16.msra.mxu0 %v846
    %2819 = vmatprep.subr.bf16.mxu0 0
    %2820 = vmatpush1.bf16.msra.mxu0 %v847
    %2821 = vmatprep.subr.bf16.mxu0 0
    %2822 = vmatpush1.bf16.msra.mxu0 %v848
    %2823 = vmatprep.subr.bf16.mxu0 0
    %2824 = vmatpush1.bf16.msra.mxu0 %v849
    %2825 = vmatprep.subr.bf16.mxu0 0
    %2826 = vmatpush1.bf16.msra.mxu0 %v850
    %2827 = vmatprep.subr.bf16.mxu0 0
    %2828 = vmatpush1.bf16.msra.mxu0 %v851
    %2829 = vmatprep.subr.bf16.mxu0 0
    %2830 = vmatpush1.bf16.msra.mxu0 %v852
    %2831 = vmatprep.subr.bf16.mxu0 0
    %2832 = vmatpush1.bf16.msra.mxu0 %v853
    %2833 = vmatprep.subr.bf16.mxu0 0
    %2834 = vmatpush1.bf16.msra.mxu0 %v854
    %2835 = vmatprep.subr.bf16.mxu0 0
    %2836 = vmatpush1.bf16.msra.mxu0 %v855
    %2837 = vmatprep.subr.bf16.mxu0 0
    %2838 = vmatpush1.bf16.msra.mxu0 %v856
    %2839 = vmatprep.subr.bf16.mxu0 0
    %2840 = vmatpush1.bf16.msra.mxu0 %v857
    %2841 = vmatprep.subr.bf16.mxu0 0
    %2842 = vmatpush1.bf16.msra.mxu0 %v858
    %2843 = vmatprep.subr.bf16.mxu0 0
    %2844 = vmatpush1.bf16.msra.mxu0 %v859
    %2845 = vmatprep.subr.bf16.mxu0 0
    %2846 = vmatpush1.bf16.msra.mxu0 %v860
    %2847 = vmatprep.mubr.bf16.mxu0 %v2637
    %2848 = vmatmul.mubr.bf16.gmra.mrb[0].mxu0 %v2636
    %v2849 = vpop.f32.mrb[0].mxu0
    %v2850 = vadd.f32 %v2810, %v2849
    %v2851 = vpop.f32.mrb[0].mxu0
    %v2852 = vpop.f32.mrb[0].mxu0
    %v2853 = vpop.f32.mrb[0].mxu0
    %2854 = vdwg.mxu0
    %2855 = vmatprep.subr.bf16.mxu0 0
    %2856 = vmatpush1.bf16.msra.mxu0 %v861
    %2857 = vmatprep.subr.bf16.mxu0 0
    %2858 = vmatpush1.bf16.msra.mxu0 %v862
    %2859 = vmatprep.subr.bf16.mxu0 0
    %2860 = vmatpush1.bf16.msra.mxu0 %v863
    %2861 = vmatprep.subr.bf16.mxu0 0
    %2862 = vmatpush1.bf16.msra.mxu0 %v864
    %2863 = vmatprep.subr.bf16.mxu0 0
    %2864 = vmatpush1.bf16.msra.mxu0 %v865
    %2865 = vmatprep.subr.bf16.mxu0 0
    %2866 = vmatpush1.bf16.msra.mxu0 %v866
    %2867 = vmatprep.subr.bf16.mxu0 0
    %2868 = vmatpush1.bf16.msra.mxu0 %v867
    %2869 = vmatprep.subr.bf16.mxu0 0
    %2870 = vmatpush1.bf16.msra.mxu0 %v868
    %2871 = vmatprep.subr.bf16.mxu0 0
    %2872 = vmatpush1.bf16.msra.mxu0 %v869
    %2873 = vmatprep.subr.bf16.mxu0 0
    %2874 = vmatpush1.bf16.msra.mxu0 %v870
    %2875 = vmatprep.subr.bf16.mxu0 0
    %2876 = vmatpush1.bf16.msra.mxu0 %v871
    %2877 = vmatprep.subr.bf16.mxu0 0
    %2878 = vmatpush1.bf16.msra.mxu0 %v872
    %2879 = vmatprep.subr.bf16.mxu0 0
    %2880 = vmatpush1.bf16.msra.mxu0 %v873
    %2881 = vmatprep.subr.bf16.mxu0 0
    %2882 = vmatpush1.bf16.msra.mxu0 %v874
    %2883 = vmatprep.subr.bf16.mxu0 0
    %2884 = vmatpush1.bf16.msra.mxu0 %v875
    %2885 = vmatprep.subr.bf16.mxu0 0
    %2886 = vmatpush1.bf16.msra.mxu0 %v876
    %2887 = vmatprep.mubr.bf16.mxu0 %v2639
    %2888 = vmatmul.mubr.bf16.gmra.mrb[0].mxu0 %v2638
    %v2889 = vpop.f32.mrb[0].mxu0
    %v2890 = vadd.f32 %v2850, %v2889
    %v2891 = vpop.f32.mrb[0].mxu0
    %v2892 = vpop.f32.mrb[0].mxu0
    %v2893 = vpop.f32.mrb[0].mxu0
    %2894 = vdwg.mxu0
    %2895 = vmatprep.subr.bf16.mxu0 0
    %2896 = vmatpush1.bf16.msra.mxu0 %v877
    %2897 = vmatprep.subr.bf16.mxu0 0
    %2898 = vmatpush1.bf16.msra.mxu0 %v878
    %2899 = vmatprep.subr.bf16.mxu0 0
    %2900 = vmatpush1.bf16.msra.mxu0 %v879
    %2901 = vmatprep.subr.bf16.mxu0 0
    %2902 = vmatpush1.bf16.msra.mxu0 %v880
    %2903 = vmatprep.subr.bf16.mxu0 0
    %2904 = vmatpush1.bf16.msra.mxu0 0
    %2905 = vmatprep.subr.bf16.mxu0 0
    %2906 = vmatpush1.bf16.msra.mxu0 0
    %2907 = vmatprep.subr.bf16.mxu0 0
    %2908 = vmatpush1.bf16.msra.mxu0 0
    %2909 = vmatprep.subr.bf16.mxu0 0
    %2910 = vmatpush1.bf16.msra.mxu0 0
    %2911 = vmatprep.subr.bf16.mxu0 0
    %2912 = vmatpush1.bf16.msra.mxu0 0
    %2913 = vmatprep.subr.bf16.mxu0 0
    %2914 = vmatpush1.bf16.msra.mxu0 0
    %2915 = vmatprep.subr.bf16.mxu0 0
    %2916 = vmatpush1.bf16.msra.mxu0 0
    %2917 = vmatprep.subr.bf16.mxu0 0
    %2918 = vmatpush1.bf16.msra.mxu0 0
    %2919 = vmatprep.subr.bf16.mxu0 0
    %2920 = vmatpush1.bf16.msra.mxu0 0
    %2921 = vmatprep.subr.bf16.mxu0 0
    %2922 = vmatpush1.bf16.msra.mxu0 0
    %2923 = vmatprep.subr.bf16.mxu0 0
    %2924 = vmatpush1.bf16.msra.mxu0 0
    %2925 = vmatprep.subr.bf16.mxu0 0
    %2926 = vmatpush1.bf16.msra.mxu0 0
    %2927 = vmatprep.mubr.bf16.mxu0 0
    %2928 = vmatmul.mubr.bf16.gmra.mrb[0].mxu0 %v2653
    %v2929 = vpop.f32.mrb[0].mxu0
    %v2930 = vadd.f32 %v2890, %v2929
    %v2931 = vpop.f32.mrb[0].mxu0
    %v2932 = vpop.f32.mrb[0].mxu0
    %v2933 = vpop.f32.mrb[0].mxu0
    %2934 = vdwg.mxu0
    %v2935 = vmax.f32 %v2930, 0.0
    %v2936 = vpack.c.bf16 %v2935, %v2935
    %v2937 = vld [vmem:[%s3 + $0x80] sm:$0xf]
    %v2938 = vld [vmem:[%s3 + $0x84] sm:$0xf]
    %v2939 = vld [vmem:[%s3 + $0x88] sm:$0xf]
    %v2940 = vld [vmem:[%s3 + $0x8c] sm:$0xf]
    %v2941 = vld [vmem:[%s3 + $0x90] sm:$0xf]
    %v2942 = vld [vmem:[%s3 + $0x94] sm:$0xf]
    %v2943 = vld [vmem:[%s3 + $0x98] sm:$0xf]
    %v2944 = vld [vmem:[%s3 + $0x9c] sm:$0xf]
    %v2953 = vunpack.c.l.b16 %v2937
    %v2954 = vunpack.c.l.b16 %v2938
    %v2955 = vunpack.c.l.b16 %v2939
    %v2956 = vunpack.c.l.b16 %v2940
    %v2957 = vunpack.c.l.b16 %v2941
    %v2958 = vunpack.c.l.b16 %v2942
    %v2959 = vunpack.c.l.b16 %v2943
    %v2960 = vunpack.c.l.b16 %v2944
    %v2961 = vpack.c.b16 %v2954, %v2953
    %v2962 = vpack.c.b16 %v2956, %v2955
    %v2963 = vpack.c.b16 %v2958, %v2957
    %v2964 = vpack.c.b16 %v2960, %v2959
    %v2970 = vsel %vm981, %v2936, 0
    %2972 = vmatprep.subr.bf16.mxu0 0
    %2973 = vmatpush1.bf16.msra.mxu0 %v2961
    %2974 = vmatprep.subr.bf16.mxu0 0
    %2975 = vmatpush1.bf16.msra.mxu0 %v2962
    %2976 = vmatprep.subr.bf16.mxu0 0
    %2977 = vmatpush1.bf16.msra.mxu0 %v2963
    %2978 = vmatprep.subr.bf16.mxu0 0
    %2979 = vmatpush1.bf16.msra.mxu0 %v2964
    %2980 = vmatprep.subr.bf16.mxu0 0
    %2981 = vmatpush1.bf16.msra.mxu0 0
    %2982 = vmatprep.subr.bf16.mxu0 0
    %2983 = vmatpush1.bf16.msra.mxu0 0
    %2984 = vmatprep.subr.bf16.mxu0 0
    %2985 = vmatpush1.bf16.msra.mxu0 0
    %2986 = vmatprep.subr.bf16.mxu0 0
    %2987 = vmatpush1.bf16.msra.mxu0 0
    %2988 = vmatprep.subr.bf16.mxu0 0
    %2989 = vmatpush1.bf16.msra.mxu0 0
    %2990 = vmatprep.subr.bf16.mxu0 0
    %2991 = vmatpush1.bf16.msra.mxu0 0
    %2992 = vmatprep.subr.bf16.mxu0 0
    %2993 = vmatpush1.bf16.msra.mxu0 0
    %2994 = vmatprep.subr.bf16.mxu0 0
    %2995 = vmatpush1.bf16.msra.mxu0 0
    %2996 = vmatprep.subr.bf16.mxu0 0
    %2997 = vmatpush1.bf16.msra.mxu0 0
    %2998 = vmatprep.subr.bf16.mxu0 0
    %2999 = vmatpush1.bf16.msra.mxu0 0
    %3000 = vmatprep.subr.bf16.mxu0 0
    %3001 = vmatpush1.bf16.msra.mxu0 0
    %3002 = vmatprep.subr.bf16.mxu0 0
    %3003 = vmatpush1.bf16.msra.mxu0 0
    %3004 = vmatprep.mubr.bf16.mxu0 0
    %3005 = vmatmul.mubr.bf16.gmra.mrb[0].mxu0 %v2970
    %v3006 = vpop.f32.mrb[0].mxu0
    %v3007 = vadd.f32 0.0, %v3006
    %v3008 = vpop.f32.mrb[0].mxu0
    %v3009 = vpop.f32.mrb[0].mxu0
    %v3010 = vpop.f32.mrb[0].mxu0
    %3011 = vdwg.mxu0
    %v3012 = vadd.f32 %v2599, %v3007
    %v3013 = vld [vmem:[%s4] sm:$0x1]
    %v3015 = vlaneseq
    %v3016 = vshrl.u32 %v3015, 7
    %v3017 = vsub.s32 0, %v3016
    %v3018 = vrot.slane %v3013, %v3017
    %v3020 = vadd.f32 %v3012, %v3018
    %v3021 = vmax.f32 %v3020, 0.0
    %v3022 = vpack.c.bf16 %v3021, %v3021
    %v3023 = vld [vmem:[%s5] sm:$0xf]
    %v3024 = vld [vmem:[%s5 + $0x4] sm:$0xf]
    %v3025 = vld [vmem:[%s5 + $0x8] sm:$0xf]
    %v3026 = vld [vmem:[%s5 + $0xc] sm:$0xf]
    %v3027 = vld [vmem:[%s5 + $0x10] sm:$0xf]
    %v3028 = vld [vmem:[%s5 + $0x14] sm:$0xf]
    %v3029 = vld [vmem:[%s5 + $0x18] sm:$0xf]
    %v3030 = vld [vmem:[%s5 + $0x1c] sm:$0xf]
    %v3031 = vld [vmem:[%s5 + $0x20] sm:$0xf]
    %v3032 = vld [vmem:[%s5 + $0x24] sm:$0xf]
    %v3033 = vld [vmem:[%s5 + $0x28] sm:$0xf]
    %v3034 = vld [vmem:[%s5 + $0x2c] sm:$0xf]
    %v3035 = vld [vmem:[%s5 + $0x30] sm:$0xf]
    %v3036 = vld [vmem:[%s5 + $0x34] sm:$0xf]
    %v3037 = vld [vmem:[%s5 + $0x38] sm:$0xf]
    %v3038 = vld [vmem:[%s5 + $0x3c] sm:$0xf]
    %v3039 = vld [vmem:[%s6] sm:$0x1]
    %v3041 = vlaneseq
    %v3042 = vshrl.u32 %v3041, 7
    %v3043 = vsub.s32 0, %v3042
    %v3044 = vrot.slane %v3039, %v3043
    %v3062 = vunpack.c.l.b16 %v3023
    %v3063 = vunpack.c.l.b16 %v3024
    %v3064 = vunpack.c.l.b16 %v3025
    %v3065 = vunpack.c.l.b16 %v3026
    %v3066 = vunpack.c.l.b16 %v3027
    %v3067 = vunpack.c.l.b16 %v3028
    %v3068 = vunpack.c.l.b16 %v3029
    %v3069 = vunpack.c.l.b16 %v3030
    %v3070 = vunpack.c.l.b16 %v3031
    %v3071 = vunpack.c.l.b16 %v3032
    %v3072 = vunpack.c.l.b16 %v3033
    %v3073 = vunpack.c.l.b16 %v3034
    %v3074 = vunpack.c.l.b16 %v3035
    %v3075 = vunpack.c.l.b16 %v3036
    %v3076 = vunpack.c.l.b16 %v3037
    %v3077 = vunpack.c.l.b16 %v3038
    %v3078 = vpack.c.b16 %v3063, %v3062
    %v3079 = vpack.c.b16 %v3065, %v3064
    %v3080 = vpack.c.b16 %v3067, %v3066
    %v3081 = vpack.c.b16 %v3069, %v3068
    %v3082 = vpack.c.b16 %v3071, %v3070
    %v3083 = vpack.c.b16 %v3073, %v3072
    %v3084 = vpack.c.b16 %v3075, %v3074
    %v3085 = vpack.c.b16 %v3077, %v3076
    %3094 = vmatprep.subr.bf16.mxu0 0
    %3095 = vmatpush1.bf16.msra.mxu0 %v3078
    %3096 = vmatprep.subr.bf16.mxu0 0
    %3097 = vmatpush1.bf16.msra.mxu0 %v3079
    %3098 = vmatprep.subr.bf16.mxu0 0
    %3099 = vmatpush1.bf16.msra.mxu0 %v3080
    %3100 = vmatprep.subr.bf16.mxu0 0
    %3101 = vmatpush1.bf16.msra.mxu0 %v3081
    %3102 = vmatprep.subr.bf16.mxu0 0
    %3103 = vmatpush1.bf16.msra.mxu0 %v3082
    %3104 = vmatprep.subr.bf16.mxu0 0
    %3105 = vmatpush1.bf16.msra.mxu0 %v3083
    %3106 = vmatprep.subr.bf16.mxu0 0
    %3107 = vmatpush1.bf16.msra.mxu0 %v3084
    %3108 = vmatprep.subr.bf16.mxu0 0
    %3109 = vmatpush1.bf16.msra.mxu0 %v3085
    %3110 = vmatprep.subr.bf16.mxu0 0
    %3111 = vmatpush1.bf16.msra.mxu0 0
    %3112 = vmatprep.subr.bf16.mxu0 0
    %3113 = vmatpush1.bf16.msra.mxu0 0
    %3114 = vmatprep.subr.bf16.mxu0 0
    %3115 = vmatpush1.bf16.msra.mxu0 0
    %3116 = vmatprep.subr.bf16.mxu0 0
    %3117 = vmatpush1.bf16.msra.mxu0 0
    %3118 = vmatprep.subr.bf16.mxu0 0
    %3119 = vmatpush1.bf16.msra.mxu0 0
    %3120 = vmatprep.subr.bf16.mxu0 0
    %3121 = vmatpush1.bf16.msra.mxu0 0
    %3122 = vmatprep.subr.bf16.mxu0 0
    %3123 = vmatpush1.bf16.msra.mxu0 0
    %3124 = vmatprep.subr.bf16.mxu0 0
    %3125 = vmatpush1.bf16.msra.mxu0 0
    %3126 = vmatprep.mubr.bf16.mxu0 0
    %3127 = vmatmul.mubr.bf16.gmra.mrb[0].mxu0 %v3022
    %v3128 = vpop.f32.mrb[0].mxu0
    %v3129 = vadd.f32 %v3044, %v3128
    %v3130 = vpop.f32.mrb[0].mxu0
    %v3131 = vpop.f32.mrb[0].mxu0
    %v3132 = vpop.f32.mrb[0].mxu0
    %3133 = vdwg.mxu0
    %3134 = vst [vmem:[#allocation5] sm:$0x3] %v3129
    // Predicated region
    $region34: #{a_call__.1} parent=1 // pred_check
      _
    $region35: #{a_call__.1} parent=1 // pred_check_branch
      %3136 = sbr.rel (0) target = $region37
    $region36: #{a_call__.1} parent=1 // pred_region
      %s3138 = ssub.s32 32, 32
      %3139 = vsyncadd [#allocation4], %s3138
      %s3141 = sshll.u32 [#allocation5], 4
      %s3142 = int_to_ptr.vmem [resolvable:$true] %s3141
      %3144 = dma.vmem_to_hbm [thread:$0]  %s3142, 32, %s7, [#allocation4]
    $region37: #{a_call__.1} parent=1 // pred_fallthru
      _
    // Predicated region
    $region38: #{a_call__.1} parent=1 // pred_check
      _
    $region39: #{a_call__.1} parent=1 // pred_check_branch
      %3146 = sbr.rel (0) target = $region41
    $region40: #{a_call__.1} parent=1 // pred_region
      %3147 = dma.done [#allocation4], 32
    $region41: #{a_call__.1} parent=1 // pred_fallthru
      _
    %3148 = vsyncpa [#allocation3], 1
    %3149 = vsyncpa [#allocation4], 1

</llo_original>
